<compile_context>
chip_gen: v5e
topology: v5e:2x2
jax: 0.10.0
libtpu: 0.0.40
codegen_flags: <defaults>
</compile_context>

<pallas_src>
import functools
import math

import jax
import jax.numpy as jnp
from jax.experimental import pallas as pl
from jax.experimental.pallas import tpu as pltpu


def encoder_layer_kernel(x_ref, in_w_ref, in_b_ref, out_w_ref, out_b_ref,
                         ln1_w_ref, ln1_b_ref, w1_ref, b1_ref, w2_ref, b2_ref,
                         ln2_w_ref, ln2_b_ref, o_ref, *, nhead):
    """One TransformerEncoderLayer (post-norm, ReLU) for a (TB, L, E) batch tile."""
    f32 = jnp.float32
    eps = 1e-5
    x = x_ref[...].astype(f32)                 # (TB, L, E)
    TB, L, E = x.shape
    M = TB * L
    d = E // nhead
    cdt = in_w_ref.dtype                       # matmul compute dtype (bf16)

    xm = x.reshape(M, E)                       # batch folded into the matmul M dim

    # ---- QKV projection: one (M, E) x (E, 3E) MXU matmul, f32 accumulation.
    #      The 1/sqrt(d) attention scale is already folded into the Q columns. ----
    qkv = jnp.dot(xm.astype(cdt), in_w_ref[...],
                  preferred_element_type=f32) + in_b_ref[...]
    q = qkv[:, :E].reshape(TB, L, E)
    k = qkv[:, E:2 * E].reshape(TB, L, E)
    v = qkv[:, 2 * E:].reshape(TB, L, E)

    # ---- Multi-head self-attention (heads statically unrolled, batched over the tile).
    #      Head outputs are concatenated along lanes and pushed through ONE K=E
    #      out-projection matmul (full MXU contraction depth, no f32 accumulate adds). ----
    head_outs = []
    for h in range(nhead):
        sl = slice(h * d, (h + 1) * d)
        qh = q[:, :, sl].astype(cdt)                       # (TB, L, d), pre-scaled
        kh = k[:, :, sl].astype(cdt)
        vh = v[:, :, sl].astype(cdt)
        s = jnp.einsum('bqd,bkd->bqk', qh, kh,
                       preferred_element_type=f32)         # (TB, L, L) f32
        s = s - jnp.max(s, axis=-1, keepdims=True)
        p = jnp.exp(s)                                     # unnormalized probs (f32)
        denom = jnp.sum(p, axis=-1, keepdims=True)
        oh = jnp.einsum('bqk,bkd->bqd', p.astype(cdt), vh,
                        preferred_element_type=f32)        # (TB, L, d)
        oh = oh * pl.reciprocal(denom, approx=True)        # normalize after P·V (EUP)
        head_outs.append(oh.astype(cdt))
    attn_cat = jnp.concatenate(head_outs, axis=-1).reshape(M, E)   # (M, E) bf16
    attn = jnp.dot(attn_cat, out_w_ref[...],
                   preferred_element_type=f32) + out_b_ref[...]

    # ---- Residual + LayerNorm1 (f32) ----
    x1 = xm + attn
    mu = jnp.mean(x1, axis=-1, keepdims=True)
    var = jnp.mean((x1 - mu) ** 2, axis=-1, keepdims=True)
    x1 = (x1 - mu) * jax.lax.rsqrt(var + eps) * ln1_w_ref[...] + ln1_b_ref[...]

    # ---- Feed-forward (bf16 matmuls, f32 accumulation; h1 kept bf16 after ReLU) ----
    h1 = jnp.dot(x1.astype(cdt), w1_ref[...],
                 preferred_element_type=f32) + b1_ref[...]
    h1 = jnp.maximum(h1, 0.0).astype(cdt)                  # ReLU, then bf16 intermediate
    h2 = jnp.dot(h1, w2_ref[...],
                 preferred_element_type=f32) + b2_ref[...]

    # ---- Residual + LayerNorm2 (f32) ----
    x2 = x1 + h2
    mu = jnp.mean(x2, axis=-1, keepdims=True)
    var = jnp.mean((x2 - mu) ** 2, axis=-1, keepdims=True)
    x2 = (x2 - mu) * jax.lax.rsqrt(var + eps) * ln2_w_ref[...] + ln2_b_ref[...]

    o_ref[...] = x2.reshape(TB, L, E).astype(o_ref.dtype)


def _const_spec(shape):
    """Whole-array block whose index never changes across the grid -> single-buffer it
    (double-buffering a constant-index operand only wastes VMEM)."""
    idx = lambda b, _n=len(shape): (0,) * _n
    return pl.BlockSpec(shape, idx, pipeline_mode=pl.Buffered(1))


def _tpu_generation():
    """(num_tensorcores, vmem_limit_bytes, target_rows) for the attached TPU generation."""
    try:
        kind = jax.devices()[0].device_kind.lower()
    except Exception:
        kind = ""
    is_v7 = "v7" in kind
    num_cores = 2 if is_v7 else 1                       # v7x: 2 TCs/chip; v5e/v6e: 1
    vmem_limit = (48 << 20) if is_v7 else (100 << 20)   # 64 MiB vs 128 MiB physical VMEM
    target_rows = 512 if is_v7 else 1024                # M-fill target (256-deep MXU mult)
    return num_cores, vmem_limit, target_rows


def _choose_batch_tile(B, L, num_cores, target_rows):
    """Rows per grid step M = tb*L should approach target_rows (MXU M-fill).  Only split
    the batch across grid steps when there is more than one TensorCore (v7x); on v7x
    prefer 2 steps per core (pipelined activation DMA) if each step still has >=256 rows."""
    L = max(L, 1)
    tb = max(1, min(B, target_rows // L))
    if num_cores > 1 and B >= num_cores:
        tb_2per = max(1, B // (2 * num_cores))
        tb_1per = max(1, B // num_cores)
        tb = min(tb, tb_2per if tb_2per * L >= 256 else tb_1per)
    return tb


def encoder_layer(x, p, nhead):
    """x: (B, L, E) -> (B, L, E); one fused Pallas kernel, grid over batch tiles."""
    B, L, E = x.shape
    nhid = p["w1"].shape[1]
    assert E % nhead == 0, "nfeature must be divisible by nhead"
    assert (E // nhead) % 8 == 0, "head dim should be a multiple of 8 (sublane packing)"

    num_cores, vmem_limit, target_rows = _tpu_generation()
    tb = _choose_batch_tile(B, L, num_cores, target_rows)
    nsteps = pl.cdiv(B, tb)
    Bp = nsteps * tb
    xin = x if Bp == B else jnp.pad(x, ((0, Bp - B), (0, 0), (0, 0)))  # pad tail batch

    kernel = functools.partial(encoder_layer_kernel, nhead=nhead)
    out = pl.pallas_call(
        kernel,
        out_shape=jax.ShapeDtypeStruct((Bp, L, E), x.dtype),
        grid=(nsteps,),
        in_specs=[
            pl.BlockSpec((tb, L, E), lambda b: (b, 0, 0)),
            _const_spec((E, 3 * E)), _const_spec((1, 3 * E)),    # in_proj  (pre-T) w / b
            _const_spec((E, E)), _const_spec((1, E)),            # out_proj (pre-T) w / b
            _const_spec((1, E)), _const_spec((1, E)),            # ln1 w / b
            _const_spec((E, nhid)), _const_spec((1, nhid)),      # linear1  (pre-T) w / b
            _const_spec((nhid, E)), _const_spec((1, E)),         # linear2  (pre-T) w / b
            _const_spec((1, E)), _const_spec((1, E)),            # ln2 w / b
        ],
        out_specs=pl.BlockSpec((tb, L, E), lambda b: (b, 0, 0)),
        compiler_params=pltpu.CompilerParams(
            dimension_semantics=("parallel",),
            vmem_limit_bytes=vmem_limit,
        ),
    )(xin, p["in_w"], p["in_b"], p["out_w"], p["out_b"],
      p["ln1_w"], p["ln1_b"], p["w1"], p["b1"], p["w2"], p["b2"],
      p["ln2_w"], p["ln2_b"])
    return out if Bp == B else out[:B]


def trans_encoder_forward(x_lbe, kernel_params, nhead):
    """Reproduces TransEncorder.forward: x (L, B, E) -> (L, B, E)."""
    x = jnp.transpose(x_lbe, (1, 0, 2))        # (B, L, E) kernel layout
    for layer_params in kernel_params:
        x = encoder_layer(x, layer_params, nhead)
    return jnp.transpose(x, (1, 0, 2))         # back to (L, B, E)


def _xavier_uniform(key, shape):
    fan_out, fan_in = shape
    a = math.sqrt(6.0 / (fan_in + fan_out))
    return jax.random.uniform(key, shape, jnp.float32, -a, a)


def init_params(key, nfeature, nhid, nlayers):
    """Per-layer parameters in PyTorch nn.TransformerEncoderLayer shapes (out, in)."""
    params = []
    E = nfeature
    for _ in range(nlayers):
        keys = jax.random.split(key, 5)
        key = keys[0]
        params.append({
            "in_w":  _xavier_uniform(keys[1], (3 * E, E)),   # in_proj_weight
            "in_b":  jnp.zeros((3 * E,), jnp.float32),
            "out_w": _xavier_uniform(keys[2], (E, E)),       # out_proj.weight
            "out_b": jnp.zeros((E,), jnp.float32),
            "ln1_w": jnp.ones((E,), jnp.float32),
            "ln1_b": jnp.zeros((E,), jnp.float32),
            "w1":    _xavier_uniform(keys[3], (nhid, E)),    # linear1.weight
            "b1":    jnp.zeros((nhid,), jnp.float32),
            "w2":    _xavier_uniform(keys[4], (E, nhid)),    # linear2.weight
            "b2":    jnp.zeros((E,), jnp.float32),
            "ln2_w": jnp.ones((E,), jnp.float32),
            "ln2_b": jnp.zeros((E,), jnp.float32),
        })
    return params


def prepare_params(torch_params, nhead, compute_dtype=jnp.bfloat16):
    """PyTorch layout -> kernel layout: matmul weights pre-transposed to (in, out), cast
    to the compute dtype (bf16); biases / LayerNorm params stay f32.  The 1/sqrt(d)
    attention scale is folded into the Q slice of in_proj weight and bias."""
    prepared = []
    for p in torch_params:
        E = p["out_w"].shape[0]
        d = E // nhead
        scale = 1.0 / math.sqrt(d)
        col_scale = jnp.concatenate([jnp.full((E,), scale, jnp.float32),
                                     jnp.ones((2 * E,), jnp.float32)])
        in_w_t = p["in_w"].T.astype(jnp.float32) * col_scale[None, :]     # (E, 3E)
        in_b = p["in_b"].astype(jnp.float32) * col_scale
        prepared.append({
            "in_w":  in_w_t.astype(compute_dtype),
            "in_b":  in_b.reshape(1, -1),
            "out_w": p["out_w"].T.astype(compute_dtype),
            "out_b": p["out_b"].reshape(1, -1).astype(jnp.float32),
            "ln1_w": p["ln1_w"].reshape(1, -1).astype(jnp.float32),
            "ln1_b": p["ln1_b"].reshape(1, -1).astype(jnp.float32),
            "w1":    p["w1"].T.astype(compute_dtype),
            "b1":    p["b1"].reshape(1, -1).astype(jnp.float32),
            "w2":    p["w2"].T.astype(compute_dtype),
            "b2":    p["b2"].reshape(1, -1).astype(jnp.float32),
            "ln2_w": p["ln2_w"].reshape(1, -1).astype(jnp.float32),
            "ln2_b": p["ln2_b"].reshape(1, -1).astype(jnp.float32),
        })
    return prepared


if __name__ == "__main__":
    # Small config consistent with TransEncorder(nfeature, nhead, nhid, dropout, nlayers).
    # E and nhid are multiples of 128 so all last dims / stores are lane-dense.
    L, B, E = 16, 4, 128            # (length, batch, feature)
    nhead, nhid, nlayers = 4, 256, 2

    key = jax.random.PRNGKey(0)
    k_x, k_p = jax.random.split(key)
    x = jax.random.normal(k_x, (L, B, E), jnp.float32)
    params = prepare_params(init_params(k_p, E, nhid, nlayers), nhead,
                            compute_dtype=jnp.bfloat16)

    out = trans_encoder_forward(x, params, nhead)
    jax.block_until_ready(out)
    assert out.shape == (L, B, E)
    print("KERNEL_OK")
</pallas_src>

<mosaic_0001>
module attributes {stable_mosaic.version = 11 : i64} {
  func.func @encoder_layer_kernel(%arg0: i32, %arg1: memref<4x16x128xf32, #tpu.memory_space<vmem>>, %arg2: memref<128x384xbf16, #tpu.memory_space<vmem>>, %arg3: memref<1x384xf32, #tpu.memory_space<vmem>>, %arg4: memref<128x128xbf16, #tpu.memory_space<vmem>>, %arg5: memref<1x128xf32, #tpu.memory_space<vmem>>, %arg6: memref<1x128xf32, #tpu.memory_space<vmem>>, %arg7: memref<1x128xf32, #tpu.memory_space<vmem>>, %arg8: memref<128x256xbf16, #tpu.memory_space<vmem>>, %arg9: memref<1x256xf32, #tpu.memory_space<vmem>>, %arg10: memref<256x128xbf16, #tpu.memory_space<vmem>>, %arg11: memref<1x128xf32, #tpu.memory_space<vmem>>, %arg12: memref<1x128xf32, #tpu.memory_space<vmem>>, %arg13: memref<1x128xf32, #tpu.memory_space<vmem>>, %arg14: memref<4x16x128xf32, #tpu.memory_space<vmem>>) attributes {dimension_semantics = [#tpu.dimension_semantics<parallel>], iteration_bounds = array<i64: 1>, scalar_prefetch = 0 : i64, scratch_operands = 0 : i64, tpu.core_type = #tpu.core_type<tc>, window_params = [{transform_indices = @transform_0, window_bounds = array<i64: 4, 16, 128>}, {pipeline_mode = #tpu.pipeline_mode<synchronous>, transform_indices = @transform_1, window_bounds = array<i64: 128, 384>}, {pipeline_mode = #tpu.pipeline_mode<synchronous>, transform_indices = @transform_2, window_bounds = array<i64: 1, 384>}, {pipeline_mode = #tpu.pipeline_mode<synchronous>, transform_indices = @transform_3, window_bounds = array<i64: 128, 128>}, {pipeline_mode = #tpu.pipeline_mode<synchronous>, transform_indices = @transform_4, window_bounds = array<i64: 1, 128>}, {pipeline_mode = #tpu.pipeline_mode<synchronous>, transform_indices = @transform_5, window_bounds = array<i64: 1, 128>}, {pipeline_mode = #tpu.pipeline_mode<synchronous>, transform_indices = @transform_6, window_bounds = array<i64: 1, 128>}, {pipeline_mode = #tpu.pipeline_mode<synchronous>, transform_indices = @transform_7, window_bounds = array<i64: 128, 256>}, {pipeline_mode = #tpu.pipeline_mode<synchronous>, transform_indices = @transform_8, window_bounds = array<i64: 1, 256>}, {pipeline_mode = #tpu.pipeline_mode<synchronous>, transform_indices = @transform_9, window_bounds = array<i64: 256, 128>}, {pipeline_mode = #tpu.pipeline_mode<synchronous>, transform_indices = @transform_10, window_bounds = array<i64: 1, 128>}, {pipeline_mode = #tpu.pipeline_mode<synchronous>, transform_indices = @transform_11, window_bounds = array<i64: 1, 128>}, {pipeline_mode = #tpu.pipeline_mode<synchronous>, transform_indices = @transform_12, window_bounds = array<i64: 1, 128>}, {transform_indices = @transform_13, window_bounds = array<i64: 4, 16, 128>}]} {
    %c0 = arith.constant 0 : index
    %c0_0 = arith.constant 0 : index
    %c0_1 = arith.constant 0 : index
    %0 = vector.load %arg1[%c0, %c0_0, %c0_1] : memref<4x16x128xf32, #tpu.memory_space<vmem>>, vector<4x16x128xf32>
    %1 = vector.shape_cast %0 : vector<4x16x128xf32> to vector<64x128xf32>
    %2 = arith.truncf %1 : vector<64x128xf32> to vector<64x128xbf16>
    %c0_2 = arith.constant 0 : index
    %c0_3 = arith.constant 0 : index
    %3 = vector.load %arg2[%c0_2, %c0_3] : memref<128x384xbf16, #tpu.memory_space<vmem>>, vector<128x384xbf16>
    %cst = arith.constant dense<0.000000e+00> : vector<64x384xf32>
    %4 = tpu.matmul %2, %3, %cst {dimension_numbers = #tpu.dot_dimension_numbers<[1], [0], [0], [1], [0, 0, 1, 1], [], []>} : vector<64x128xbf16>, vector<128x384xbf16>, vector<64x384xf32> -> vector<64x384xf32>
    %c0_4 = arith.constant 0 : index
    %c0_5 = arith.constant 0 : index
    %5 = vector.load %arg3[%c0_4, %c0_5] : memref<1x384xf32, #tpu.memory_space<vmem>>, vector<1x384xf32>
    %6 = vector.broadcast %5 : vector<1x384xf32> to vector<64x384xf32>
    %7 = arith.addf %4, %6 : vector<64x384xf32>
    %8 = vector.extract_strided_slice %7 {offsets = [0, 0], sizes = [64, 128], strides = [1, 1]} : vector<64x384xf32> to vector<64x128xf32>
    %9 = vector.shape_cast %8 : vector<64x128xf32> to vector<4x16x128xf32>
    %10 = vector.extract_strided_slice %7 {offsets = [0, 128], sizes = [64, 128], strides = [1, 1]} : vector<64x384xf32> to vector<64x128xf32>
    %11 = vector.shape_cast %10 : vector<64x128xf32> to vector<4x16x128xf32>
    %12 = vector.extract_strided_slice %7 {offsets = [0, 256], sizes = [64, 128], strides = [1, 1]} : vector<64x384xf32> to vector<64x128xf32>
    %13 = vector.shape_cast %12 : vector<64x128xf32> to vector<4x16x128xf32>
    %14 = vector.extract_strided_slice %9 {offsets = [0, 0, 0], sizes = [4, 16, 32], strides = [1, 1, 1]} : vector<4x16x128xf32> to vector<4x16x32xf32>
    %15 = arith.truncf %14 : vector<4x16x32xf32> to vector<4x16x32xbf16>
    %16 = vector.extract_strided_slice %11 {offsets = [0, 0, 0], sizes = [4, 16, 32], strides = [1, 1, 1]} : vector<4x16x128xf32> to vector<4x16x32xf32>
    %17 = arith.truncf %16 : vector<4x16x32xf32> to vector<4x16x32xbf16>
    %18 = vector.extract_strided_slice %13 {offsets = [0, 0, 0], sizes = [4, 16, 32], strides = [1, 1, 1]} : vector<4x16x128xf32> to vector<4x16x32xf32>
    %19 = arith.truncf %18 : vector<4x16x32xf32> to vector<4x16x32xbf16>
    "tpu.trace_start"() <{level = 10 : i32, message = "bqd,bkd->bqk"}> : () -> ()
    %cst_6 = arith.constant dense<0.000000e+00> : vector<4x16x16xf32>
    %20 = tpu.matmul %15, %17, %cst_6 {dimension_numbers = #tpu.dot_dimension_numbers<[2], [2], [1], [1], [0, 0, 0, 1, 1, 1], [0], [0]>} : vector<4x16x32xbf16>, vector<4x16x32xbf16>, vector<4x16x16xf32> -> vector<4x16x16xf32>
    "tpu.trace_stop"() : () -> ()
    %cst_7 = arith.constant dense<0xFF800000> : vector<4x16xf32>
    %21 = vector.multi_reduction <maximumf>, %20, %cst_7 [2] : vector<4x16x16xf32> to vector<4x16xf32>
    %22 = vector.shape_cast %21 : vector<4x16xf32> to vector<4x16x1xf32>
    %23 = vector.broadcast %22 : vector<4x16x1xf32> to vector<4x16x16xf32>
    %24 = arith.subf %20, %23 : vector<4x16x16xf32>
    %25 = math.exp %24 : vector<4x16x16xf32>
    %cst_8 = arith.constant dense<0.000000e+00> : vector<4x16xf32>
    %26 = vector.multi_reduction <add>, %25, %cst_8 [2] : vector<4x16x16xf32> to vector<4x16xf32>
    %27 = vector.shape_cast %26 : vector<4x16xf32> to vector<4x16x1xf32>
    %28 = arith.truncf %25 : vector<4x16x16xf32> to vector<4x16x16xbf16>
    "tpu.trace_start"() <{level = 10 : i32, message = "bqk,bkd->bqd"}> : () -> ()
    %cst_9 = arith.constant dense<0.000000e+00> : vector<4x16x32xf32>
    %29 = tpu.matmul %28, %19, %cst_9 {dimension_numbers = #tpu.dot_dimension_numbers<[2], [1], [1], [2], [0, 0, 0, 1, 1, 2], [0], [0]>} : vector<4x16x16xbf16>, vector<4x16x32xbf16>, vector<4x16x32xf32> -> vector<4x16x32xf32>
    "tpu.trace_stop"() : () -> ()
    %30 = tpu.reciprocal %27 {approx = true} : vector<4x16x1xf32> -> vector<4x16x1xf32>
    %31 = vector.broadcast %30 : vector<4x16x1xf32> to vector<4x16x32xf32>
    %32 = arith.mulf %29, %31 : vector<4x16x32xf32>
    %33 = arith.truncf %32 : vector<4x16x32xf32> to vector<4x16x32xbf16>
    %34 = vector.extract_strided_slice %9 {offsets = [0, 0, 32], sizes = [4, 16, 32], strides = [1, 1, 1]} : vector<4x16x128xf32> to vector<4x16x32xf32>
    %35 = arith.truncf %34 : vector<4x16x32xf32> to vector<4x16x32xbf16>
    %36 = vector.extract_strided_slice %11 {offsets = [0, 0, 32], sizes = [4, 16, 32], strides = [1, 1, 1]} : vector<4x16x128xf32> to vector<4x16x32xf32>
    %37 = arith.truncf %36 : vector<4x16x32xf32> to vector<4x16x32xbf16>
    %38 = vector.extract_strided_slice %13 {offsets = [0, 0, 32], sizes = [4, 16, 32], strides = [1, 1, 1]} : vector<4x16x128xf32> to vector<4x16x32xf32>
    %39 = arith.truncf %38 : vector<4x16x32xf32> to vector<4x16x32xbf16>
    "tpu.trace_start"() <{level = 10 : i32, message = "bqd,bkd->bqk"}> : () -> ()
    %cst_10 = arith.constant dense<0.000000e+00> : vector<4x16x16xf32>
    %40 = tpu.matmul %35, %37, %cst_10 {dimension_numbers = #tpu.dot_dimension_numbers<[2], [2], [1], [1], [0, 0, 0, 1, 1, 1], [0], [0]>} : vector<4x16x32xbf16>, vector<4x16x32xbf16>, vector<4x16x16xf32> -> vector<4x16x16xf32>
    "tpu.trace_stop"() : () -> ()
    %cst_11 = arith.constant dense<0xFF800000> : vector<4x16xf32>
    %41 = vector.multi_reduction <maximumf>, %40, %cst_11 [2] : vector<4x16x16xf32> to vector<4x16xf32>
    %42 = vector.shape_cast %41 : vector<4x16xf32> to vector<4x16x1xf32>
    %43 = vector.broadcast %42 : vector<4x16x1xf32> to vector<4x16x16xf32>
    %44 = arith.subf %40, %43 : vector<4x16x16xf32>
    %45 = math.exp %44 : vector<4x16x16xf32>
    %cst_12 = arith.constant dense<0.000000e+00> : vector<4x16xf32>
    %46 = vector.multi_reduction <add>, %45, %cst_12 [2] : vector<4x16x16xf32> to vector<4x16xf32>
    %47 = vector.shape_cast %46 : vector<4x16xf32> to vector<4x16x1xf32>
    %48 = arith.truncf %45 : vector<4x16x16xf32> to vector<4x16x16xbf16>
    "tpu.trace_start"() <{level = 10 : i32, message = "bqk,bkd->bqd"}> : () -> ()
    %cst_13 = arith.constant dense<0.000000e+00> : vector<4x16x32xf32>
    %49 = tpu.matmul %48, %39, %cst_13 {dimension_numbers = #tpu.dot_dimension_numbers<[2], [1], [1], [2], [0, 0, 0, 1, 1, 2], [0], [0]>} : vector<4x16x16xbf16>, vector<4x16x32xbf16>, vector<4x16x32xf32> -> vector<4x16x32xf32>
    "tpu.trace_stop"() : () -> ()
    %50 = tpu.reciprocal %47 {approx = true} : vector<4x16x1xf32> -> vector<4x16x1xf32>
    %51 = vector.broadcast %50 : vector<4x16x1xf32> to vector<4x16x32xf32>
    %52 = arith.mulf %49, %51 : vector<4x16x32xf32>
    %53 = arith.truncf %52 : vector<4x16x32xf32> to vector<4x16x32xbf16>
    %54 = vector.extract_strided_slice %9 {offsets = [0, 0, 64], sizes = [4, 16, 32], strides = [1, 1, 1]} : vector<4x16x128xf32> to vector<4x16x32xf32>
    %55 = arith.truncf %54 : vector<4x16x32xf32> to vector<4x16x32xbf16>
    %56 = vector.extract_strided_slice %11 {offsets = [0, 0, 64], sizes = [4, 16, 32], strides = [1, 1, 1]} : vector<4x16x128xf32> to vector<4x16x32xf32>
    %57 = arith.truncf %56 : vector<4x16x32xf32> to vector<4x16x32xbf16>
    %58 = vector.extract_strided_slice %13 {offsets = [0, 0, 64], sizes = [4, 16, 32], strides = [1, 1, 1]} : vector<4x16x128xf32> to vector<4x16x32xf32>
    %59 = arith.truncf %58 : vector<4x16x32xf32> to vector<4x16x32xbf16>
    "tpu.trace_start"() <{level = 10 : i32, message = "bqd,bkd->bqk"}> : () -> ()
    %cst_14 = arith.constant dense<0.000000e+00> : vector<4x16x16xf32>
    %60 = tpu.matmul %55, %57, %cst_14 {dimension_numbers = #tpu.dot_dimension_numbers<[2], [2], [1], [1], [0, 0, 0, 1, 1, 1], [0], [0]>} : vector<4x16x32xbf16>, vector<4x16x32xbf16>, vector<4x16x16xf32> -> vector<4x16x16xf32>
    "tpu.trace_stop"() : () -> ()
    %cst_15 = arith.constant dense<0xFF800000> : vector<4x16xf32>
    %61 = vector.multi_reduction <maximumf>, %60, %cst_15 [2] : vector<4x16x16xf32> to vector<4x16xf32>
    %62 = vector.shape_cast %61 : vector<4x16xf32> to vector<4x16x1xf32>
    %63 = vector.broadcast %62 : vector<4x16x1xf32> to vector<4x16x16xf32>
    %64 = arith.subf %60, %63 : vector<4x16x16xf32>
    %65 = math.exp %64 : vector<4x16x16xf32>
    %cst_16 = arith.constant dense<0.000000e+00> : vector<4x16xf32>
    %66 = vector.multi_reduction <add>, %65, %cst_16 [2] : vector<4x16x16xf32> to vector<4x16xf32>
    %67 = vector.shape_cast %66 : vector<4x16xf32> to vector<4x16x1xf32>
    %68 = arith.truncf %65 : vector<4x16x16xf32> to vector<4x16x16xbf16>
    "tpu.trace_start"() <{level = 10 : i32, message = "bqk,bkd->bqd"}> : () -> ()
    %cst_17 = arith.constant dense<0.000000e+00> : vector<4x16x32xf32>
    %69 = tpu.matmul %68, %59, %cst_17 {dimension_numbers = #tpu.dot_dimension_numbers<[2], [1], [1], [2], [0, 0, 0, 1, 1, 2], [0], [0]>} : vector<4x16x16xbf16>, vector<4x16x32xbf16>, vector<4x16x32xf32> -> vector<4x16x32xf32>
    "tpu.trace_stop"() : () -> ()
    %70 = tpu.reciprocal %67 {approx = true} : vector<4x16x1xf32> -> vector<4x16x1xf32>
    %71 = vector.broadcast %70 : vector<4x16x1xf32> to vector<4x16x32xf32>
    %72 = arith.mulf %69, %71 : vector<4x16x32xf32>
    %73 = arith.truncf %72 : vector<4x16x32xf32> to vector<4x16x32xbf16>
    %74 = vector.extract_strided_slice %9 {offsets = [0, 0, 96], sizes = [4, 16, 32], strides = [1, 1, 1]} : vector<4x16x128xf32> to vector<4x16x32xf32>
    %75 = arith.truncf %74 : vector<4x16x32xf32> to vector<4x16x32xbf16>
    %76 = vector.extract_strided_slice %11 {offsets = [0, 0, 96], sizes = [4, 16, 32], strides = [1, 1, 1]} : vector<4x16x128xf32> to vector<4x16x32xf32>
    %77 = arith.truncf %76 : vector<4x16x32xf32> to vector<4x16x32xbf16>
    %78 = vector.extract_strided_slice %13 {offsets = [0, 0, 96], sizes = [4, 16, 32], strides = [1, 1, 1]} : vector<4x16x128xf32> to vector<4x16x32xf32>
    %79 = arith.truncf %78 : vector<4x16x32xf32> to vector<4x16x32xbf16>
    "tpu.trace_start"() <{level = 10 : i32, message = "bqd,bkd->bqk"}> : () -> ()
    %cst_18 = arith.constant dense<0.000000e+00> : vector<4x16x16xf32>
    %80 = tpu.matmul %75, %77, %cst_18 {dimension_numbers = #tpu.dot_dimension_numbers<[2], [2], [1], [1], [0, 0, 0, 1, 1, 1], [0], [0]>} : vector<4x16x32xbf16>, vector<4x16x32xbf16>, vector<4x16x16xf32> -> vector<4x16x16xf32>
    "tpu.trace_stop"() : () -> ()
    %cst_19 = arith.constant dense<0xFF800000> : vector<4x16xf32>
    %81 = vector.multi_reduction <maximumf>, %80, %cst_19 [2] : vector<4x16x16xf32> to vector<4x16xf32>
    %82 = vector.shape_cast %81 : vector<4x16xf32> to vector<4x16x1xf32>
    %83 = vector.broadcast %82 : vector<4x16x1xf32> to vector<4x16x16xf32>
    %84 = arith.subf %80, %83 : vector<4x16x16xf32>
    %85 = math.exp %84 : vector<4x16x16xf32>
    %cst_20 = arith.constant dense<0.000000e+00> : vector<4x16xf32>
    %86 = vector.multi_reduction <add>, %85, %cst_20 [2] : vector<4x16x16xf32> to vector<4x16xf32>
    %87 = vector.shape_cast %86 : vector<4x16xf32> to vector<4x16x1xf32>
    %88 = arith.truncf %85 : vector<4x16x16xf32> to vector<4x16x16xbf16>
    "tpu.trace_start"() <{level = 10 : i32, message = "bqk,bkd->bqd"}> : () -> ()
    %cst_21 = arith.constant dense<0.000000e+00> : vector<4x16x32xf32>
    %89 = tpu.matmul %88, %79, %cst_21 {dimension_numbers = #tpu.dot_dimension_numbers<[2], [1], [1], [2], [0, 0, 0, 1, 1, 2], [0], [0]>} : vector<4x16x16xbf16>, vector<4x16x32xbf16>, vector<4x16x32xf32> -> vector<4x16x32xf32>
    "tpu.trace_stop"() : () -> ()
    %90 = tpu.reciprocal %87 {approx = true} : vector<4x16x1xf32> -> vector<4x16x1xf32>
    %91 = vector.broadcast %90 : vector<4x16x1xf32> to vector<4x16x32xf32>
    %92 = arith.mulf %89, %91 : vector<4x16x32xf32>
    %93 = arith.truncf %92 : vector<4x16x32xf32> to vector<4x16x32xbf16>
    %94 = tpu.concatenate %33, %53, %73, %93 in 2 : vector<4x16x32xbf16>, vector<4x16x32xbf16>, vector<4x16x32xbf16>, vector<4x16x32xbf16> -> vector<4x16x128xbf16>
    %95 = vector.shape_cast %94 : vector<4x16x128xbf16> to vector<64x128xbf16>
    %c0_22 = arith.constant 0 : index
    %c0_23 = arith.constant 0 : index
    %96 = vector.load %arg4[%c0_22, %c0_23] : memref<128x128xbf16, #tpu.memory_space<vmem>>, vector<128x128xbf16>
    %cst_24 = arith.constant dense<0.000000e+00> : vector<64x128xf32>
    %97 = tpu.matmul %95, %96, %cst_24 {dimension_numbers = #tpu.dot_dimension_numbers<[1], [0], [0], [1], [0, 0, 1, 1], [], []>} : vector<64x128xbf16>, vector<128x128xbf16>, vector<64x128xf32> -> vector<64x128xf32>
    %c0_25 = arith.constant 0 : index
    %c0_26 = arith.constant 0 : index
    %98 = vector.load %arg5[%c0_25, %c0_26] : memref<1x128xf32, #tpu.memory_space<vmem>>, vector<1x128xf32>
    %99 = vector.broadcast %98 : vector<1x128xf32> to vector<64x128xf32>
    %100 = arith.addf %97, %99 : vector<64x128xf32>
    %101 = arith.addf %1, %100 : vector<64x128xf32>
    %cst_27 = arith.constant dense<0.000000e+00> : vector<64xf32>
    %102 = vector.multi_reduction <add>, %101, %cst_27 [1] : vector<64x128xf32> to vector<64xf32>
    %103 = vector.shape_cast %102 : vector<64xf32> to vector<64x1xf32>
    %cst_28 = arith.constant 1.280000e+02 : f32
    %104 = vector.broadcast %cst_28 : f32 to vector<64x1xf32>
    %105 = arith.divf %103, %104 : vector<64x1xf32>
    %106 = vector.broadcast %105 : vector<64x1xf32> to vector<64x128xf32>
    %107 = arith.subf %101, %106 : vector<64x128xf32>
    %108 = arith.mulf %107, %107 : vector<64x128xf32>
    %cst_29 = arith.constant dense<0.000000e+00> : vector<64xf32>
    %109 = vector.multi_reduction <add>, %108, %cst_29 [1] : vector<64x128xf32> to vector<64xf32>
    %110 = vector.shape_cast %109 : vector<64xf32> to vector<64x1xf32>
    %cst_30 = arith.constant 1.280000e+02 : f32
    %111 = vector.broadcast %cst_30 : f32 to vector<64x1xf32>
    %112 = arith.divf %110, %111 : vector<64x1xf32>
    %113 = vector.broadcast %105 : vector<64x1xf32> to vector<64x128xf32>
    %114 = arith.subf %101, %113 : vector<64x128xf32>
    %cst_31 = arith.constant 9.99999974E-6 : f32
    %115 = vector.broadcast %cst_31 : f32 to vector<64x1xf32>
    %116 = arith.addf %112, %115 : vector<64x1xf32>
    %117 = math.rsqrt %116 : vector<64x1xf32>
    %118 = vector.broadcast %117 : vector<64x1xf32> to vector<64x128xf32>
    %119 = arith.mulf %114, %118 : vector<64x128xf32>
    %c0_32 = arith.constant 0 : index
    %c0_33 = arith.constant 0 : index
    %120 = vector.load %arg6[%c0_32, %c0_33] : memref<1x128xf32, #tpu.memory_space<vmem>>, vector<1x128xf32>
    %121 = vector.broadcast %120 : vector<1x128xf32> to vector<64x128xf32>
    %122 = arith.mulf %119, %121 : vector<64x128xf32>
    %c0_34 = arith.constant 0 : index
    %c0_35 = arith.constant 0 : index
    %123 = vector.load %arg7[%c0_34, %c0_35] : memref<1x128xf32, #tpu.memory_space<vmem>>, vector<1x128xf32>
    %124 = vector.broadcast %123 : vector<1x128xf32> to vector<64x128xf32>
    %125 = arith.addf %122, %124 : vector<64x128xf32>
    %126 = arith.truncf %125 : vector<64x128xf32> to vector<64x128xbf16>
    %c0_36 = arith.constant 0 : index
    %c0_37 = arith.constant 0 : index
    %127 = vector.load %arg8[%c0_36, %c0_37] : memref<128x256xbf16, #tpu.memory_space<vmem>>, vector<128x256xbf16>
    %cst_38 = arith.constant dense<0.000000e+00> : vector<64x256xf32>
    %128 = tpu.matmul %126, %127, %cst_38 {dimension_numbers = #tpu.dot_dimension_numbers<[1], [0], [0], [1], [0, 0, 1, 1], [], []>} : vector<64x128xbf16>, vector<128x256xbf16>, vector<64x256xf32> -> vector<64x256xf32>
    %c0_39 = arith.constant 0 : index
    %c0_40 = arith.constant 0 : index
    %129 = vector.load %arg9[%c0_39, %c0_40] : memref<1x256xf32, #tpu.memory_space<vmem>>, vector<1x256xf32>
    %130 = vector.broadcast %129 : vector<1x256xf32> to vector<64x256xf32>
    %131 = arith.addf %128, %130 : vector<64x256xf32>
    %cst_41 = arith.constant 0.000000e+00 : f32
    %132 = vector.broadcast %cst_41 : f32 to vector<64x256xf32>
    %133 = arith.maximumf %131, %132 : vector<64x256xf32>
    %134 = arith.truncf %133 : vector<64x256xf32> to vector<64x256xbf16>
    %c0_42 = arith.constant 0 : index
    %c0_43 = arith.constant 0 : index
    %135 = vector.load %arg10[%c0_42, %c0_43] : memref<256x128xbf16, #tpu.memory_space<vmem>>, vector<256x128xbf16>
    %cst_44 = arith.constant dense<0.000000e+00> : vector<64x128xf32>
    %136 = tpu.matmul %134, %135, %cst_44 {dimension_numbers = #tpu.dot_dimension_numbers<[1], [0], [0], [1], [0, 0, 1, 1], [], []>} : vector<64x256xbf16>, vector<256x128xbf16>, vector<64x128xf32> -> vector<64x128xf32>
    %c0_45 = arith.constant 0 : index
    %c0_46 = arith.constant 0 : index
    %137 = vector.load %arg11[%c0_45, %c0_46] : memref<1x128xf32, #tpu.memory_space<vmem>>, vector<1x128xf32>
    %138 = vector.broadcast %137 : vector<1x128xf32> to vector<64x128xf32>
    %139 = arith.addf %136, %138 : vector<64x128xf32>
    %140 = arith.addf %125, %139 : vector<64x128xf32>
    %cst_47 = arith.constant dense<0.000000e+00> : vector<64xf32>
    %141 = vector.multi_reduction <add>, %140, %cst_47 [1] : vector<64x128xf32> to vector<64xf32>
    %142 = vector.shape_cast %141 : vector<64xf32> to vector<64x1xf32>
    %cst_48 = arith.constant 1.280000e+02 : f32
    %143 = vector.broadcast %cst_48 : f32 to vector<64x1xf32>
    %144 = arith.divf %142, %143 : vector<64x1xf32>
    %145 = vector.broadcast %144 : vector<64x1xf32> to vector<64x128xf32>
    %146 = arith.subf %140, %145 : vector<64x128xf32>
    %147 = arith.mulf %146, %146 : vector<64x128xf32>
    %cst_49 = arith.constant dense<0.000000e+00> : vector<64xf32>
    %148 = vector.multi_reduction <add>, %147, %cst_49 [1] : vector<64x128xf32> to vector<64xf32>
    %149 = vector.shape_cast %148 : vector<64xf32> to vector<64x1xf32>
    %cst_50 = arith.constant 1.280000e+02 : f32
    %150 = vector.broadcast %cst_50 : f32 to vector<64x1xf32>
    %151 = arith.divf %149, %150 : vector<64x1xf32>
    %152 = vector.broadcast %144 : vector<64x1xf32> to vector<64x128xf32>
    %153 = arith.subf %140, %152 : vector<64x128xf32>
    %cst_51 = arith.constant 9.99999974E-6 : f32
    %154 = vector.broadcast %cst_51 : f32 to vector<64x1xf32>
    %155 = arith.addf %151, %154 : vector<64x1xf32>
    %156 = math.rsqrt %155 : vector<64x1xf32>
    %157 = vector.broadcast %156 : vector<64x1xf32> to vector<64x128xf32>
    %158 = arith.mulf %153, %157 : vector<64x128xf32>
    %c0_52 = arith.constant 0 : index
    %c0_53 = arith.constant 0 : index
    %159 = vector.load %arg12[%c0_52, %c0_53] : memref<1x128xf32, #tpu.memory_space<vmem>>, vector<1x128xf32>
    %160 = vector.broadcast %159 : vector<1x128xf32> to vector<64x128xf32>
    %161 = arith.mulf %158, %160 : vector<64x128xf32>
    %c0_54 = arith.constant 0 : index
    %c0_55 = arith.constant 0 : index
    %162 = vector.load %arg13[%c0_54, %c0_55] : memref<1x128xf32, #tpu.memory_space<vmem>>, vector<1x128xf32>
    %163 = vector.broadcast %162 : vector<1x128xf32> to vector<64x128xf32>
    %164 = arith.addf %161, %163 : vector<64x128xf32>
    %165 = vector.shape_cast %164 : vector<64x128xf32> to vector<4x16x128xf32>
    %c0_56 = arith.constant 0 : index
    %c0_57 = arith.constant 0 : index
    %c0_58 = arith.constant 0 : index
    %166 = vector.load %arg14[%c0_56, %c0_57, %c0_58] : memref<4x16x128xf32, #tpu.memory_space<vmem>>, vector<4x16x128xf32>
    tpu.vector_store %arg14[%c0_56, %c0_57, %c0_58], %165 {strides = array<i32>} : memref<4x16x128xf32, #tpu.memory_space<vmem>>, vector<4x16x128xf32>,
    return
  }
  func.func @transform_0(%arg0: i32) -> (i32, i32, i32) {
    %c0_i32 = arith.constant 0 : i32
    %c0_i32_0 = arith.constant 0 : i32
    %c0_i32_1 = arith.constant 0 : i32
    return %arg0, %c0_i32, %c0_i32_0 : i32, i32, i32
  }
  func.func @transform_1(%arg0: i32) -> (i32, i32) {
    %c0_i32 = arith.constant 0 : i32
    %c0_i32_0 = arith.constant 0 : i32
    %c0_i32_1 = arith.constant 0 : i32
    return %c0_i32, %c0_i32_0 : i32, i32
  }
  func.func @transform_2(%arg0: i32) -> (i32, i32) {
    %c0_i32 = arith.constant 0 : i32
    %c0_i32_0 = arith.constant 0 : i32
    %c0_i32_1 = arith.constant 0 : i32
    return %c0_i32, %c0_i32_0 : i32, i32
  }
  func.func @transform_3(%arg0: i32) -> (i32, i32) {
    %c0_i32 = arith.constant 0 : i32
    %c0_i32_0 = arith.constant 0 : i32
    %c0_i32_1 = arith.constant 0 : i32
    return %c0_i32, %c0_i32_0 : i32, i32
  }
  func.func @transform_4(%arg0: i32) -> (i32, i32) {
    %c0_i32 = arith.constant 0 : i32
    %c0_i32_0 = arith.constant 0 : i32
    %c0_i32_1 = arith.constant 0 : i32
    return %c0_i32, %c0_i32_0 : i32, i32
  }
  func.func @transform_5(%arg0: i32) -> (i32, i32) {
    %c0_i32 = arith.constant 0 : i32
    %c0_i32_0 = arith.constant 0 : i32
    %c0_i32_1 = arith.constant 0 : i32
    return %c0_i32, %c0_i32_0 : i32, i32
  }
  func.func @transform_6(%arg0: i32) -> (i32, i32) {
    %c0_i32 = arith.constant 0 : i32
    %c0_i32_0 = arith.constant 0 : i32
    %c0_i32_1 = arith.constant 0 : i32
    return %c0_i32, %c0_i32_0 : i32, i32
  }
  func.func @transform_7(%arg0: i32) -> (i32, i32) {
    %c0_i32 = arith.constant 0 : i32
    %c0_i32_0 = arith.constant 0 : i32
    %c0_i32_1 = arith.constant 0 : i32
    return %c0_i32, %c0_i32_0 : i32, i32
  }
  func.func @transform_8(%arg0: i32) -> (i32, i32) {
    %c0_i32 = arith.constant 0 : i32
    %c0_i32_0 = arith.constant 0 : i32
    %c0_i32_1 = arith.constant 0 : i32
    return %c0_i32, %c0_i32_0 : i32, i32
  }
  func.func @transform_9(%arg0: i32) -> (i32, i32) {
    %c0_i32 = arith.constant 0 : i32
    %c0_i32_0 = arith.constant 0 : i32
    %c0_i32_1 = arith.constant 0 : i32
    return %c0_i32, %c0_i32_0 : i32, i32
  }
  func.func @transform_10(%arg0: i32) -> (i32, i32) {
    %c0_i32 = arith.constant 0 : i32
    %c0_i32_0 = arith.constant 0 : i32
    %c0_i32_1 = arith.constant 0 : i32
    return %c0_i32, %c0_i32_0 : i32, i32
  }
  func.func @transform_11(%arg0: i32) -> (i32, i32) {
    %c0_i32 = arith.constant 0 : i32
    %c0_i32_0 = arith.constant 0 : i32
    %c0_i32_1 = arith.constant 0 : i32
    return %c0_i32, %c0_i32_0 : i32, i32
  }
  func.func @transform_12(%arg0: i32) -> (i32, i32) {
    %c0_i32 = arith.constant 0 : i32
    %c0_i32_0 = arith.constant 0 : i32
    %c0_i32_1 = arith.constant 0 : i32
    return %c0_i32, %c0_i32_0 : i32, i32
  }
  func.func @transform_13(%arg0: i32) -> (i32, i32, i32) {
    %c0_i32 = arith.constant 0 : i32
    %c0_i32_0 = arith.constant 0 : i32
    %c0_i32_1 = arith.constant 0 : i32
    return %arg0, %c0_i32, %c0_i32_0 : i32, i32, i32
  }
}

</mosaic_0001>

<llo_original>
// kernel: tpu_custom_call.1
$region0: #{tpu_custom_call.1}
  #allocation0 [shape = 'u32[]', space=smem, size = 0x4, offset = 0x4, fixed_abs, tag = 'smem constant byte address 0x4 - core index']
  #allocation1 [shape = 'u32[72,128]{1,0:T(1,128)}', space=vmem, size = 0x9000, scoped, tag = 'internal scratch']
  %s0 = inlined_call_operand.hbm [shape: f32[4,16,128], index: 0, kind: input, shape index: {}]
  %s1 = inlined_call_operand.hbm [shape: bf16[128,384], index: 1, kind: input, shape index: {}]
  %s2 = inlined_call_operand.hbm [shape: f32[1,384], index: 2, kind: input, shape index: {}]
  %s3 = inlined_call_operand.hbm [shape: bf16[128,128], index: 3, kind: input, shape index: {}]
  %s4 = inlined_call_operand.vmem [shape: f32[1,128], index: 4, kind: input, shape index: {}]
  %s5 = inlined_call_operand.vmem [shape: f32[1,128], index: 5, kind: input, shape index: {}]
  %s6 = inlined_call_operand.vmem [shape: f32[1,128], index: 6, kind: input, shape index: {}]
  %s7 = inlined_call_operand.hbm [shape: bf16[128,256], index: 7, kind: input, shape index: {}]
  %s8 = inlined_call_operand.vmem [shape: f32[1,256], index: 8, kind: input, shape index: {}]
  %s9 = inlined_call_operand.hbm [shape: bf16[256,128], index: 9, kind: input, shape index: {}]
  %s10 = inlined_call_operand.vmem [shape: f32[1,128], index: 10, kind: input, shape index: {}]
  %s11 = inlined_call_operand.vmem [shape: f32[1,128], index: 11, kind: input, shape index: {}]
  %s12 = inlined_call_operand.vmem [shape: f32[1,128], index: 12, kind: input, shape index: {}]
  %s13 = inlined_call_operand.hbm [shape: f32[4,16,128], index: 13, kind: output, shape index: {}]
  %s14 = sld [smem:[#allocation0]]
  $region86: #{tpu_custom_call.1} parent=0
    _
  %s16 = ssub.s32 1, %s14
  %s17 = scalar_select 0, %s16, %s14
  $region1: #{tpu_custom_call.1} parent=0
    #allocation2 [shape = 'u8[32768]{0}', space=vmem, size = 0x8000, scoped, tag = 'input window, operand 0, single buffered']
    #allocation3 [shape = 's32[1]{0}', space=sflag, size = 0x4, scoped, tag = 'scoped memory for tpu_custom_call.1']
    #allocation4 [shape = 's32[1]{0}', space=sflag, size = 0x4, scoped, tag = 'scoped memory for tpu_custom_call.1']
    #allocation5 [shape = 'u8[98304]{0}', space=vmem, size = 0x18000, scoped, tag = 'input window, operand 1, single buffered']
    #allocation6 [shape = 's32[1]{0}', space=sflag, size = 0x4, scoped, tag = 'scoped memory for tpu_custom_call.1']
    #allocation7 [shape = 'u8[1536]{0}', space=vmem, size = 0x800, scoped, tag = 'input window, operand 2, single buffered']
    #allocation8 [shape = 'u8[32768]{0}', space=vmem, size = 0x8000, scoped, tag = 'input window, operand 3, single buffered']
    #allocation9 [shape = 's32[1]{0}', space=sflag, size = 0x4, scoped, tag = 'scoped memory for tpu_custom_call.1']
    #allocation10 [shape = 'u8[65536]{0}', space=vmem, size = 0x10000, scoped, tag = 'input window, operand 7, single buffered']
    #allocation11 [shape = 'u8[65536]{0}', space=vmem, size = 0x10000, scoped, tag = 'input window, operand 9, single buffered']
    #allocation12 [shape = 's32[1]{0}', space=sflag, size = 0x4, scoped, tag = 'scoped memory for tpu_custom_call.1']
    #allocation13 [shape = 'u8[32768]{0}', space=vmem, size = 0x8000, scoped, tag = 'output window, operand 0, single buffered']
    %18 = vsyncpa [#allocation3], 0
    %19 = vsyncpa [#allocation6], 0
    %20 = vsyncpa [#allocation9], 0
    %21 = vsyncpa [#allocation12], 0
    %22 = vsyncpa [#allocation4], 0
    // Predicated region
    $region2: #{tpu_custom_call.1} parent=1 // pred_check
      _
    $region3: #{tpu_custom_call.1} parent=1 // pred_check_branch
      %24 = sbr.rel (0) target = $region5
    $region4: #{tpu_custom_call.1} parent=1 // pred_region
      %26 = vsyncadd [#allocation3], 0
      %s27 = sshll.u32 %s0, 4
      %s28 = int_to_ptr.hbm [resolvable:$true] %s27
      %s29 = sshll.u32 [#allocation2], 4
      %s30 = int_to_ptr.vmem [resolvable:$true] %s29
      %35 = dma.hbm_to_vmem [thread:$0]  %s28, 1024, %s30, [#allocation3], 128, 128, 8
    $region5: #{tpu_custom_call.1} parent=1 // pred_fallthru
      _
    // Predicated region
    $region6: #{tpu_custom_call.1} parent=1 // pred_check
      _
    $region7: #{tpu_custom_call.1} parent=1 // pred_check_branch
      %37 = sbr.rel (0) target = $region9
    $region8: #{tpu_custom_call.1} parent=1 // pred_region
      %39 = vsyncadd [#allocation6], 0
      %s40 = sshll.u32 %s1, 4
      %s41 = int_to_ptr.hbm [resolvable:$true] %s40
      %s42 = sshll.u32 [#allocation5], 4
      %s43 = int_to_ptr.vmem [resolvable:$true] %s42
      %48 = dma.hbm_to_vmem [thread:$0]  %s41, 3072, %s43, [#allocation6], 192, 192, 12
    $region9: #{tpu_custom_call.1} parent=1 // pred_fallthru
      _
    // Predicated region
    $region10: #{tpu_custom_call.1} parent=1 // pred_check
      _
    $region11: #{tpu_custom_call.1} parent=1 // pred_check_branch
      %50 = sbr.rel (0) target = $region13
    $region12: #{tpu_custom_call.1} parent=1 // pred_region
      %52 = vsyncadd [#allocation6], 0
      %s54 = sshll.u32 %s2, 4
      %s55 = int_to_ptr.hbm [resolvable:$true] %s54
      %s56 = sshll.u32 [#allocation7], 4
      %s57 = int_to_ptr.vmem [resolvable:$true] %s56
      %59 = dma.hbm_to_vmem [thread:$0]  %s55, 48, %s57, [#allocation6]
    $region13: #{tpu_custom_call.1} parent=1 // pred_fallthru
      _
    // Predicated region
    $region14: #{tpu_custom_call.1} parent=1 // pred_check
      _
    $region15: #{tpu_custom_call.1} parent=1 // pred_check_branch
      %61 = sbr.rel (0) target = $region17
    $region16: #{tpu_custom_call.1} parent=1 // pred_region
      %63 = vsyncadd [#allocation9], 0
      %s64 = sshll.u32 %s3, 4
      %s65 = int_to_ptr.hbm [resolvable:$true] %s64
      %s66 = sshll.u32 [#allocation8], 4
      %s67 = int_to_ptr.vmem [resolvable:$true] %s66
      %72 = dma.hbm_to_vmem [thread:$0]  %s65, 1024, %s67, [#allocation9], 64, 64, 4
    $region17: #{tpu_custom_call.1} parent=1 // pred_fallthru
      _
    // Predicated region
    $region18: #{tpu_custom_call.1} parent=1 // pred_check
      _
    $region19: #{tpu_custom_call.1} parent=1 // pred_check_branch
      %74 = sbr.rel (0) target = $region21
    $region20: #{tpu_custom_call.1} parent=1 // pred_region
      _
    $region21: #{tpu_custom_call.1} parent=1 // pred_fallthru
      _
    // Predicated region
    $region22: #{tpu_custom_call.1} parent=1 // pred_check
      _
    $region23: #{tpu_custom_call.1} parent=1 // pred_check_branch
      %76 = sbr.rel (0) target = $region25
    $region24: #{tpu_custom_call.1} parent=1 // pred_region
      _
    $region25: #{tpu_custom_call.1} parent=1 // pred_fallthru
      _
    // Predicated region
    $region26: #{tpu_custom_call.1} parent=1 // pred_check
      _
    $region27: #{tpu_custom_call.1} parent=1 // pred_check_branch
      %78 = sbr.rel (0) target = $region29
    $region28: #{tpu_custom_call.1} parent=1 // pred_region
      _
    $region29: #{tpu_custom_call.1} parent=1 // pred_fallthru
      _
    // Predicated region
    $region30: #{tpu_custom_call.1} parent=1 // pred_check
      _
    $region31: #{tpu_custom_call.1} parent=1 // pred_check_branch
      %80 = sbr.rel (0) target = $region33
    $region32: #{tpu_custom_call.1} parent=1 // pred_region
      %82 = vsyncadd [#allocation9], 0
      %s83 = sshll.u32 %s7, 4
      %s84 = int_to_ptr.hbm [resolvable:$true] %s83
      %s85 = sshll.u32 [#allocation10], 4
      %s86 = int_to_ptr.vmem [resolvable:$true] %s85
      %91 = dma.hbm_to_vmem [thread:$0]  %s84, 2048, %s86, [#allocation9], 128, 128, 8
    $region33: #{tpu_custom_call.1} parent=1 // pred_fallthru
      _
    // Predicated region
    $region34: #{tpu_custom_call.1} parent=1 // pred_check
      _
    $region35: #{tpu_custom_call.1} parent=1 // pred_check_branch
      %93 = sbr.rel (0) target = $region37
    $region36: #{tpu_custom_call.1} parent=1 // pred_region
      _
    $region37: #{tpu_custom_call.1} parent=1 // pred_fallthru
      _
    // Predicated region
    $region38: #{tpu_custom_call.1} parent=1 // pred_check
      _
    $region39: #{tpu_custom_call.1} parent=1 // pred_check_branch
      %95 = sbr.rel (0) target = $region41
    $region40: #{tpu_custom_call.1} parent=1 // pred_region
      %97 = vsyncadd [#allocation12], 0
      %s98 = sshll.u32 %s9, 4
      %s99 = int_to_ptr.hbm [resolvable:$true] %s98
      %s100 = sshll.u32 [#allocation11], 4
      %s101 = int_to_ptr.vmem [resolvable:$true] %s100
      %106 = dma.hbm_to_vmem [thread:$0]  %s99, 2048, %s101, [#allocation12], 64, 64, 4
    $region41: #{tpu_custom_call.1} parent=1 // pred_fallthru
      _
    // Predicated region
    $region42: #{tpu_custom_call.1} parent=1 // pred_check
      _
    $region43: #{tpu_custom_call.1} parent=1 // pred_check_branch
      %108 = sbr.rel (0) target = $region45
    $region44: #{tpu_custom_call.1} parent=1 // pred_region
      _
    $region45: #{tpu_custom_call.1} parent=1 // pred_fallthru
      _
    // Predicated region
    $region46: #{tpu_custom_call.1} parent=1 // pred_check
      _
    $region47: #{tpu_custom_call.1} parent=1 // pred_check_branch
      %110 = sbr.rel (0) target = $region49
    $region48: #{tpu_custom_call.1} parent=1 // pred_region
      _
    $region49: #{tpu_custom_call.1} parent=1 // pred_fallthru
      _
    // Predicated region
    $region50: #{tpu_custom_call.1} parent=1 // pred_check
      _
    $region51: #{tpu_custom_call.1} parent=1 // pred_check_branch
      %112 = sbr.rel (0) target = $region53
    $region52: #{tpu_custom_call.1} parent=1 // pred_region
      _
    $region53: #{tpu_custom_call.1} parent=1 // pred_fallthru
      _
    // Predicated region
    $region54: #{tpu_custom_call.1} parent=1 // pred_check
      _
    $region55: #{tpu_custom_call.1} parent=1 // pred_check_branch
      %114 = sbr.rel (0) target = $region57
    $region56: #{tpu_custom_call.1} parent=1 // pred_region
      %116 = dma.done [#allocation3], 1024
    $region57: #{tpu_custom_call.1} parent=1 // pred_fallthru
      _
    // Predicated region
    $region58: #{tpu_custom_call.1} parent=1 // pred_check
      _
    $region59: #{tpu_custom_call.1} parent=1 // pred_check_branch
      %118 = sbr.rel (0) target = $region61
    $region60: #{tpu_custom_call.1} parent=1 // pred_region
      %120 = dma.done [#allocation6], 3072
    $region61: #{tpu_custom_call.1} parent=1 // pred_fallthru
      _
    // Predicated region
    $region62: #{tpu_custom_call.1} parent=1 // pred_check
      _
    $region63: #{tpu_custom_call.1} parent=1 // pred_check_branch
      %122 = sbr.rel (0) target = $region65
    $region64: #{tpu_custom_call.1} parent=1 // pred_region
      %124 = dma.done [#allocation6], 48
    $region65: #{tpu_custom_call.1} parent=1 // pred_fallthru
      _
    // Predicated region
    $region66: #{tpu_custom_call.1} parent=1 // pred_check
      _
    $region67: #{tpu_custom_call.1} parent=1 // pred_check_branch
      %126 = sbr.rel (0) target = $region69
    $region68: #{tpu_custom_call.1} parent=1 // pred_region
      %128 = dma.done [#allocation9], 1024
    $region69: #{tpu_custom_call.1} parent=1 // pred_fallthru
      _
    // Predicated region
    $region70: #{tpu_custom_call.1} parent=1 // pred_check
      _
    $region71: #{tpu_custom_call.1} parent=1 // pred_check_branch
      %130 = sbr.rel (0) target = $region73
    $region72: #{tpu_custom_call.1} parent=1 // pred_region
      %132 = dma.done [#allocation9], 2048
    $region73: #{tpu_custom_call.1} parent=1 // pred_fallthru
      _
    // Predicated region
    $region74: #{tpu_custom_call.1} parent=1 // pred_check
      _
    $region75: #{tpu_custom_call.1} parent=1 // pred_check_branch
      %134 = sbr.rel (0) target = $region77
    $region76: #{tpu_custom_call.1} parent=1 // pred_region
      %136 = dma.done [#allocation12], 2048
    $region77: #{tpu_custom_call.1} parent=1 // pred_fallthru
      _
    %v138 = vld [vmem:[#allocation2] sm:$0xff]
    %v139 = vld [vmem:[#allocation2 + $0x8] sm:$0xff]
    %v140 = vld [vmem:[#allocation2 + $0x10] sm:$0xff]
    %v141 = vld [vmem:[#allocation2 + $0x18] sm:$0xff]
    %v142 = vld [vmem:[#allocation2 + $0x20] sm:$0xff]
    %v143 = vld [vmem:[#allocation2 + $0x28] sm:$0xff]
    %v144 = vld [vmem:[#allocation2 + $0x30] sm:$0xff]
    %v145 = vld [vmem:[#allocation2 + $0x38] sm:$0xff]
    %v146 = vpack.c.bf16 %v139, %v138
    %v147 = vpack.c.bf16 %v141, %v140
    %v148 = vpack.c.bf16 %v143, %v142
    %v149 = vpack.c.bf16 %v145, %v144
    %v150 = vld [vmem:[#allocation5] sm:$0xff]
    %v151 = vld [vmem:[#allocation5 + $0x8] sm:$0xf]
    %v152 = vld [vmem:[#allocation5 + $0xc] sm:$0xff]
    %v153 = vld [vmem:[#allocation5 + $0x14] sm:$0xf]
    %v154 = vld [vmem:[#allocation5 + $0x18] sm:$0xff]
    %v155 = vld [vmem:[#allocation5 + $0x20] sm:$0xf]
    %v156 = vld [vmem:[#allocation5 + $0x24] sm:$0xff]
    %v157 = vld [vmem:[#allocation5 + $0x2c] sm:$0xf]
    %v158 = vld [vmem:[#allocation5 + $0x30] sm:$0xff]
    %v159 = vld [vmem:[#allocation5 + $0x38] sm:$0xf]
    %v160 = vld [vmem:[#allocation5 + $0x3c] sm:$0xff]
    %v161 = vld [vmem:[#allocation5 + $0x44] sm:$0xf]
    %v162 = vld [vmem:[#allocation5 + $0x48] sm:$0xff]
    %v163 = vld [vmem:[#allocation5 + $0x50] sm:$0xf]
    %v164 = vld [vmem:[#allocation5 + $0x54] sm:$0xff]
    %v165 = vld [vmem:[#allocation5 + $0x5c] sm:$0xf]
    %v166 = vld [vmem:[#allocation5 + $0x60] sm:$0xff]
    %v167 = vld [vmem:[#allocation5 + $0x68] sm:$0xf]
    %v168 = vld [vmem:[#allocation5 + $0x6c] sm:$0xff]
    %v169 = vld [vmem:[#allocation5 + $0x74] sm:$0xf]
    %v170 = vld [vmem:[#allocation5 + $0x78] sm:$0xff]
    %v171 = vld [vmem:[#allocation5 + $0x80] sm:$0xf]
    %v172 = vld [vmem:[#allocation5 + $0x84] sm:$0xff]
    %v173 = vld [vmem:[#allocation5 + $0x8c] sm:$0xf]
    %v174 = vld [vmem:[#allocation5 + $0x90] sm:$0xff]
    %v175 = vld [vmem:[#allocation5 + $0x98] sm:$0xf]
    %v176 = vld [vmem:[#allocation5 + $0x9c] sm:$0xff]
    %v177 = vld [vmem:[#allocation5 + $0xa4] sm:$0xf]
    %v178 = vld [vmem:[#allocation5 + $0xa8] sm:$0xff]
    %v179 = vld [vmem:[#allocation5 + $0xb0] sm:$0xf]
    %v180 = vld [vmem:[#allocation5 + $0xb4] sm:$0xff]
    %v181 = vld [vmem:[#allocation5 + $0xbc] sm:$0xf]
    %v182 = vld [vmem:[#allocation7] sm:$0x7]
    %v184 = vperm.slane %v182, 0
    %v185 = vperm.slane %v182, 1
    %v186 = vperm.slane %v182, 2
    %v222 = vunpack.c.l.b16 %v150
    %v223 = vunpack.c.h.b16 %v150
    %v224 = vunpack.c.l.b16 %v151
    %v225 = vunpack.c.l.b16 %v152
    %v226 = vunpack.c.h.b16 %v152
    %v227 = vunpack.c.l.b16 %v153
    %v228 = vunpack.c.l.b16 %v154
    %v229 = vunpack.c.h.b16 %v154
    %v230 = vunpack.c.l.b16 %v155
    %v231 = vunpack.c.l.b16 %v156
    %v232 = vunpack.c.h.b16 %v156
    %v233 = vunpack.c.l.b16 %v157
    %v234 = vunpack.c.l.b16 %v158
    %v235 = vunpack.c.h.b16 %v158
    %v236 = vunpack.c.l.b16 %v159
    %v237 = vunpack.c.l.b16 %v160
    %v238 = vunpack.c.h.b16 %v160
    %v239 = vunpack.c.l.b16 %v161
    %v240 = vunpack.c.l.b16 %v162
    %v241 = vunpack.c.h.b16 %v162
    %v242 = vunpack.c.l.b16 %v163
    %v243 = vunpack.c.l.b16 %v164
    %v244 = vunpack.c.h.b16 %v164
    %v245 = vunpack.c.l.b16 %v165
    %v246 = vunpack.c.l.b16 %v166
    %v247 = vunpack.c.h.b16 %v166
    %v248 = vunpack.c.l.b16 %v167
    %v249 = vunpack.c.l.b16 %v168
    %v250 = vunpack.c.h.b16 %v168
    %v251 = vunpack.c.l.b16 %v169
    %v252 = vunpack.c.l.b16 %v170
    %v253 = vunpack.c.h.b16 %v170
    %v254 = vunpack.c.l.b16 %v171
    %v255 = vunpack.c.l.b16 %v172
    %v256 = vunpack.c.h.b16 %v172
    %v257 = vunpack.c.l.b16 %v173
    %v258 = vunpack.c.l.b16 %v174
    %v259 = vunpack.c.h.b16 %v174
    %v260 = vunpack.c.l.b16 %v175
    %v261 = vunpack.c.l.b16 %v176
    %v262 = vunpack.c.h.b16 %v176
    %v263 = vunpack.c.l.b16 %v177
    %v264 = vunpack.c.l.b16 %v178
    %v265 = vunpack.c.h.b16 %v178
    %v266 = vunpack.c.l.b16 %v179
    %v267 = vunpack.c.l.b16 %v180
    %v268 = vunpack.c.h.b16 %v180
    %v269 = vunpack.c.l.b16 %v181
    %v270 = vpack.c.b16 %v225, %v222
    %v271 = vpack.c.b16 %v226, %v223
    %v272 = vpack.c.b16 %v227, %v224
    %v273 = vpack.c.b16 %v231, %v228
    %v274 = vpack.c.b16 %v232, %v229
    %v275 = vpack.c.b16 %v233, %v230
    %v276 = vpack.c.b16 %v237, %v234
    %v277 = vpack.c.b16 %v238, %v235
    %v278 = vpack.c.b16 %v239, %v236
    %v279 = vpack.c.b16 %v243, %v240
    %v280 = vpack.c.b16 %v244, %v241
    %v281 = vpack.c.b16 %v245, %v242
    %v282 = vpack.c.b16 %v249, %v246
    %v283 = vpack.c.b16 %v250, %v247
    %v284 = vpack.c.b16 %v251, %v248
    %v285 = vpack.c.b16 %v255, %v252
    %v286 = vpack.c.b16 %v256, %v253
    %v287 = vpack.c.b16 %v257, %v254
    %v288 = vpack.c.b16 %v261, %v258
    %v289 = vpack.c.b16 %v262, %v259
    %v290 = vpack.c.b16 %v263, %v260
    %v291 = vpack.c.b16 %v267, %v264
    %v292 = vpack.c.b16 %v268, %v265
    %v293 = vpack.c.b16 %v269, %v266
    %318 = vmatpush.bf16.msra.mxu0 %v291
    %319 = vmatpush.bf16.msra.mxu0 %v288
    %320 = vmatpush.bf16.msra.mxu0 %v285
    %321 = vmatpush.bf16.msra.mxu0 %v282
    %322 = vmatpush.bf16.msra.mxu0 %v279
    %323 = vmatpush.bf16.msra.mxu0 %v276
    %324 = vmatpush.bf16.msra.mxu0 %v273
    %325 = vmatpush.bf16.msra.mxu0 %v270
    %326 = vmatmul.bf16.gmra.mxu0 %v146
    %v327 = vpop.f32.mrf.mxu0
    %v328 = vadd.f32 %v184, %v327
    %v329 = vpop.f32.mrf.mxu0
    %v330 = vadd.f32 %v184, %v329
    %331 = vmatmul.bf16.gmra.mxu0 %v147
    %v332 = vpop.f32.mrf.mxu0
    %v333 = vadd.f32 %v184, %v332
    %v334 = vpop.f32.mrf.mxu0
    %v335 = vadd.f32 %v184, %v334
    %336 = vmatmul.bf16.gmra.mxu0 %v148
    %v337 = vpop.f32.mrf.mxu0
    %v338 = vadd.f32 %v184, %v337
    %v339 = vpop.f32.mrf.mxu0
    %v340 = vadd.f32 %v184, %v339
    %341 = vmatmul.bf16.gmra.mxu0 %v149
    %v342 = vpop.f32.mrf.mxu0
    %v343 = vadd.f32 %v184, %v342
    %v344 = vpop.f32.mrf.mxu0
    %v345 = vadd.f32 %v184, %v344
    %346 = vdwg.mxu0
    %347 = vmatpush.bf16.msra.mxu0 %v292
    %348 = vmatpush.bf16.msra.mxu0 %v289
    %349 = vmatpush.bf16.msra.mxu0 %v286
    %350 = vmatpush.bf16.msra.mxu0 %v283
    %351 = vmatpush.bf16.msra.mxu0 %v280
    %352 = vmatpush.bf16.msra.mxu0 %v277
    %353 = vmatpush.bf16.msra.mxu0 %v274
    %354 = vmatpush.bf16.msra.mxu0 %v271
    %355 = vmatmul.bf16.gmra.mxu0 %v146
    %v356 = vpop.f32.mrf.mxu0
    %v357 = vadd.f32 %v185, %v356
    %v358 = vpop.f32.mrf.mxu0
    %v359 = vadd.f32 %v185, %v358
    %360 = vmatmul.bf16.gmra.mxu0 %v147
    %v361 = vpop.f32.mrf.mxu0
    %v362 = vadd.f32 %v185, %v361
    %v363 = vpop.f32.mrf.mxu0
    %v364 = vadd.f32 %v185, %v363
    %365 = vmatmul.bf16.gmra.mxu0 %v148
    %v366 = vpop.f32.mrf.mxu0
    %v367 = vadd.f32 %v185, %v366
    %v368 = vpop.f32.mrf.mxu0
    %v369 = vadd.f32 %v185, %v368
    %370 = vmatmul.bf16.gmra.mxu0 %v149
    %v371 = vpop.f32.mrf.mxu0
    %v372 = vadd.f32 %v185, %v371
    %v373 = vpop.f32.mrf.mxu0
    %v374 = vadd.f32 %v185, %v373
    %375 = vdwg.mxu0
    %376 = vmatpush.bf16.msra.mxu0 %v293
    %377 = vmatpush.bf16.msra.mxu0 %v290
    %378 = vmatpush.bf16.msra.mxu0 %v287
    %379 = vmatpush.bf16.msra.mxu0 %v284
    %380 = vmatpush.bf16.msra.mxu0 %v281
    %381 = vmatpush.bf16.msra.mxu0 %v278
    %382 = vmatpush.bf16.msra.mxu0 %v275
    %383 = vmatpush.bf16.msra.mxu0 %v272
    %384 = vmatmul.bf16.gmra.mxu0 %v146
    %v385 = vpop.f32.mrf.mxu0
    %v386 = vadd.f32 %v186, %v385
    %v387 = vpop.f32.mrf.mxu0
    %v388 = vadd.f32 %v186, %v387
    %389 = vmatmul.bf16.gmra.mxu0 %v147
    %v390 = vpop.f32.mrf.mxu0
    %v391 = vadd.f32 %v186, %v390
    %v392 = vpop.f32.mrf.mxu0
    %v393 = vadd.f32 %v186, %v392
    %394 = vmatmul.bf16.gmra.mxu0 %v148
    %v395 = vpop.f32.mrf.mxu0
    %v396 = vadd.f32 %v186, %v395
    %v397 = vpop.f32.mrf.mxu0
    %v398 = vadd.f32 %v186, %v397
    %399 = vmatmul.bf16.gmra.mxu0 %v149
    %v400 = vpop.f32.mrf.mxu0
    %v401 = vadd.f32 %v186, %v400
    %v402 = vpop.f32.mrf.mxu0
    %v403 = vadd.f32 %v186, %v402
    %404 = vdwg.mxu0
    %v405 = vpack.c.bf16 %v328, %v328
    %v406 = vpack.c.bf16 %v330, %v330
    %v407 = vpack.c.bf16 %v333, %v333
    %v408 = vpack.c.bf16 %v335, %v335
    %v409 = vpack.c.bf16 %v338, %v338
    %v410 = vpack.c.bf16 %v340, %v340
    %v411 = vpack.c.bf16 %v343, %v343
    %v412 = vpack.c.bf16 %v345, %v345
    %v413 = vpack.c.bf16 %v357, %v357
    %v414 = vpack.c.bf16 %v359, %v359
    %v415 = vpack.c.bf16 %v362, %v362
    %v416 = vpack.c.bf16 %v364, %v364
    %v417 = vpack.c.bf16 %v367, %v367
    %v418 = vpack.c.bf16 %v369, %v369
    %v419 = vpack.c.bf16 %v372, %v372
    %v420 = vpack.c.bf16 %v374, %v374
    %v421 = vpack.c.bf16 %v386, %v386
    %v422 = vpack.c.bf16 %v388, %v388
    %v423 = vpack.c.bf16 %v391, %v391
    %v424 = vpack.c.bf16 %v393, %v393
    %v425 = vpack.c.bf16 %v396, %v396
    %v426 = vpack.c.bf16 %v398, %v398
    %v427 = vpack.c.bf16 %v401, %v401
    %v428 = vpack.c.bf16 %v403, %v403
    %v431 = vunpack.c.l.b16 %v405
    %v432 = vunpack.c.l.b16 %v406
    %v433 = vpack.c.b16 %v432, %v431
    %v436 = vunpack.c.l.b16 %v413
    %v437 = vunpack.c.l.b16 %v414
    %v438 = vpack.c.b16 %v437, %v436
    %vm439 = vcmask 261120
    %v441 = vsel %vm439, %v433, 0
    %v444 = vsel %vm439, %v438, 0
    %446 = vmatpush.bf16.xpose.msra.mxu0 0
    %447 = vmatpush.bf16.xpose.msra.mxu0 0
    %448 = vmatpush.bf16.xpose.msra.mxu0 0
    %449 = vmatpush.bf16.xpose.msra.mxu0 0
    %450 = vmatpush.bf16.xpose.msra.mxu0 0
    %451 = vmatpush.bf16.xpose.msra.mxu0 0
    %452 = vmatpush.bf16.xpose.msra.mxu0 0
    %453 = vmatpush.bf16.xpose.msra.mxu0 %v444
    %454 = vmatmul.bf16.gmra.mxu0 %v441
    %v455 = vpop.f32.mrf.mxu0
    %v456 = vadd.f32 0.0, %v455
    %v457 = vpop.f32.mrf.mxu0
    %v458 = vadd.f32 0.0, %v457
    %459 = vdwg.mxu0
    %v462 = vunpack.c.l.b16 %v407
    %v463 = vunpack.c.l.b16 %v408
    %v464 = vpack.c.b16 %v463, %v462
    %v467 = vunpack.c.l.b16 %v415
    %v468 = vunpack.c.l.b16 %v416
    %v469 = vpack.c.b16 %v468, %v467
    %v471 = vsel %vm439, %v464, 0
    %v474 = vsel %vm439, %v469, 0
    %476 = vmatpush.bf16.xpose.msra.mxu0 0
    %477 = vmatpush.bf16.xpose.msra.mxu0 0
    %478 = vmatpush.bf16.xpose.msra.mxu0 0
    %479 = vmatpush.bf16.xpose.msra.mxu0 0
    %480 = vmatpush.bf16.xpose.msra.mxu0 0
    %481 = vmatpush.bf16.xpose.msra.mxu0 0
    %482 = vmatpush.bf16.xpose.msra.mxu0 0
    %483 = vmatpush.bf16.xpose.msra.mxu0 %v474
    %484 = vmatmul.bf16.gmra.mxu0 %v471
    %v485 = vpop.f32.mrf.mxu0
    %v486 = vadd.f32 0.0, %v485
    %v487 = vpop.f32.mrf.mxu0
    %v488 = vadd.f32 0.0, %v487
    %489 = vdwg.mxu0
    %v492 = vunpack.c.l.b16 %v409
    %v493 = vunpack.c.l.b16 %v410
    %v494 = vpack.c.b16 %v493, %v492
    %v497 = vunpack.c.l.b16 %v417
    %v498 = vunpack.c.l.b16 %v418
    %v499 = vpack.c.b16 %v498, %v497
    %v501 = vsel %vm439, %v494, 0
    %v504 = vsel %vm439, %v499, 0
    %506 = vmatpush.bf16.xpose.msra.mxu0 0
    %507 = vmatpush.bf16.xpose.msra.mxu0 0
    %508 = vmatpush.bf16.xpose.msra.mxu0 0
    %509 = vmatpush.bf16.xpose.msra.mxu0 0
    %510 = vmatpush.bf16.xpose.msra.mxu0 0
    %511 = vmatpush.bf16.xpose.msra.mxu0 0
    %512 = vmatpush.bf16.xpose.msra.mxu0 0
    %513 = vmatpush.bf16.xpose.msra.mxu0 %v504
    %514 = vmatmul.bf16.gmra.mxu0 %v501
    %v515 = vpop.f32.mrf.mxu0
    %v516 = vadd.f32 0.0, %v515
    %v517 = vpop.f32.mrf.mxu0
    %v518 = vadd.f32 0.0, %v517
    %519 = vdwg.mxu0
    %v522 = vunpack.c.l.b16 %v411
    %v523 = vunpack.c.l.b16 %v412
    %v524 = vpack.c.b16 %v523, %v522
    %v527 = vunpack.c.l.b16 %v419
    %v528 = vunpack.c.l.b16 %v420
    %v529 = vpack.c.b16 %v528, %v527
    %v531 = vsel %vm439, %v524, 0
    %v534 = vsel %vm439, %v529, 0
    %536 = vmatpush.bf16.xpose.msra.mxu0 0
    %537 = vmatpush.bf16.xpose.msra.mxu0 0
    %538 = vmatpush.bf16.xpose.msra.mxu0 0
    %539 = vmatpush.bf16.xpose.msra.mxu0 0
    %540 = vmatpush.bf16.xpose.msra.mxu0 0
    %541 = vmatpush.bf16.xpose.msra.mxu0 0
    %542 = vmatpush.bf16.xpose.msra.mxu0 0
    %543 = vmatpush.bf16.xpose.msra.mxu0 %v534
    %544 = vmatmul.bf16.gmra.mxu0 %v531
    %v545 = vpop.f32.mrf.mxu0
    %v546 = vadd.f32 0.0, %v545
    %v547 = vpop.f32.mrf.mxu0
    %v548 = vadd.f32 0.0, %v547
    %549 = vdwg.mxu0
    %vm550 = vcmask 130048
    %v551 = vsel %vm550, %v456, -inf
    %552 = vmax.xlane.f32.xlu0 %v551
    %v553 = vpop.xlane.xlu0 %552
    %v554 = vsel %vm550, %v458, -inf
    %555 = vmax.xlane.f32.xlu0 %v554
    %v556 = vpop.xlane.xlu0 %555
    %v557 = vsel %vm550, %v486, -inf
    %558 = vmax.xlane.f32.xlu0 %v557
    %v559 = vpop.xlane.xlu0 %558
    %v560 = vsel %vm550, %v488, -inf
    %561 = vmax.xlane.f32.xlu0 %v560
    %v562 = vpop.xlane.xlu0 %561
    %v563 = vsel %vm550, %v516, -inf
    %564 = vmax.xlane.f32.xlu0 %v563
    %v565 = vpop.xlane.xlu0 %564
    %v566 = vsel %vm550, %v518, -inf
    %567 = vmax.xlane.f32.xlu0 %v566
    %v568 = vpop.xlane.xlu0 %567
    %v569 = vsel %vm550, %v546, -inf
    %570 = vmax.xlane.f32.xlu0 %v569
    %v571 = vpop.xlane.xlu0 %570
    %v572 = vsel %vm550, %v548, -inf
    %573 = vmax.xlane.f32.xlu0 %v572
    %v574 = vpop.xlane.xlu0 %573
    %v575 = vsub.f32 %v456, %v553
    %v576 = vsub.f32 %v458, %v556
    %v577 = vsub.f32 %v486, %v559
    %v578 = vsub.f32 %v488, %v562
    %v579 = vsub.f32 %v516, %v565
    %v580 = vsub.f32 %v518, %v568
    %v581 = vsub.f32 %v546, %v571
    %v582 = vsub.f32 %v548, %v574
    %v583 = vmul.f32 %v575, 1.442695
    %v584 = vpow.pop %v583
    %v585 = vmul.f32 %v576, 1.442695
    %v586 = vpow.pop %v585
    %v587 = vmul.f32 %v577, 1.442695
    %v588 = vpow.pop %v587
    %v589 = vmul.f32 %v578, 1.442695
    %v590 = vpow.pop %v589
    %v591 = vmul.f32 %v579, 1.442695
    %v592 = vpow.pop %v591
    %v593 = vmul.f32 %v580, 1.442695
    %v594 = vpow.pop %v593
    %v595 = vmul.f32 %v581, 1.442695
    %v596 = vpow.pop %v595
    %v597 = vmul.f32 %v582, 1.442695
    %v598 = vpow.pop %v597
    %v599 = vsel %vm550, %v584, 0.0
    %600 = vadd.xlane.f32.xlu0 %v599
    %v601 = vpop.xlane.xlu0 %600
    %v602 = vsel %vm550, %v586, 0.0
    %603 = vadd.xlane.f32.xlu0 %v602
    %v604 = vpop.xlane.xlu0 %603
    %v605 = vsel %vm550, %v588, 0.0
    %606 = vadd.xlane.f32.xlu0 %v605
    %v607 = vpop.xlane.xlu0 %606
    %v608 = vsel %vm550, %v590, 0.0
    %609 = vadd.xlane.f32.xlu0 %v608
    %v610 = vpop.xlane.xlu0 %609
    %v611 = vsel %vm550, %v592, 0.0
    %612 = vadd.xlane.f32.xlu0 %v611
    %v613 = vpop.xlane.xlu0 %612
    %v614 = vsel %vm550, %v594, 0.0
    %615 = vadd.xlane.f32.xlu0 %v614
    %v616 = vpop.xlane.xlu0 %615
    %v617 = vsel %vm550, %v596, 0.0
    %618 = vadd.xlane.f32.xlu0 %v617
    %v619 = vpop.xlane.xlu0 %618
    %v620 = vsel %vm550, %v598, 0.0
    %621 = vadd.xlane.f32.xlu0 %v620
    %v622 = vpop.xlane.xlu0 %621
    %v623 = vpack.c.bf16 %v584, %v584
    %v624 = vpack.c.bf16 %v586, %v586
    %v625 = vpack.c.bf16 %v588, %v588
    %v626 = vpack.c.bf16 %v590, %v590
    %v627 = vpack.c.bf16 %v592, %v592
    %v628 = vpack.c.bf16 %v594, %v594
    %v629 = vpack.c.bf16 %v596, %v596
    %v630 = vpack.c.bf16 %v598, %v598
    %v633 = vunpack.c.l.b16 %v623
    %v634 = vunpack.c.l.b16 %v624
    %v635 = vpack.c.b16 %v634, %v633
    %v638 = vunpack.c.l.b16 %v421
    %v639 = vunpack.c.l.b16 %v422
    %v640 = vpack.c.b16 %v639, %v638
    %v643 = vsel %vm550, %v635, 0
    %645 = vmatpush.bf16.msra.mxu0 0
    %646 = vmatpush.bf16.msra.mxu0 0
    %647 = vmatpush.bf16.msra.mxu0 0
    %648 = vmatpush.bf16.msra.mxu0 0
    %649 = vmatpush.bf16.msra.mxu0 0
    %650 = vmatpush.bf16.msra.mxu0 0
    %651 = vmatpush.bf16.msra.mxu0 0
    %652 = vmatpush.bf16.msra.mxu0 %v640
    %653 = vmatmul.bf16.gmra.mxu0 %v643
    %v654 = vpop.f32.mrf.mxu0
    %v655 = vadd.f32 0.0, %v654
    %v656 = vpop.f32.mrf.mxu0
    %v657 = vadd.f32 0.0, %v656
    %658 = vdwg.mxu0
    %v661 = vunpack.c.l.b16 %v625
    %v662 = vunpack.c.l.b16 %v626
    %v663 = vpack.c.b16 %v662, %v661
    %v666 = vunpack.c.l.b16 %v423
    %v667 = vunpack.c.l.b16 %v424
    %v668 = vpack.c.b16 %v667, %v666
    %v671 = vsel %vm550, %v663, 0
    %673 = vmatpush.bf16.msra.mxu0 0
    %674 = vmatpush.bf16.msra.mxu0 0
    %675 = vmatpush.bf16.msra.mxu0 0
    %676 = vmatpush.bf16.msra.mxu0 0
    %677 = vmatpush.bf16.msra.mxu0 0
    %678 = vmatpush.bf16.msra.mxu0 0
    %679 = vmatpush.bf16.msra.mxu0 0
    %680 = vmatpush.bf16.msra.mxu0 %v668
    %681 = vmatmul.bf16.gmra.mxu0 %v671
    %v682 = vpop.f32.mrf.mxu0
    %v683 = vadd.f32 0.0, %v682
    %v684 = vpop.f32.mrf.mxu0
    %v685 = vadd.f32 0.0, %v684
    %686 = vdwg.mxu0
    %v689 = vunpack.c.l.b16 %v627
    %v690 = vunpack.c.l.b16 %v628
    %v691 = vpack.c.b16 %v690, %v689
    %v694 = vunpack.c.l.b16 %v425
    %v695 = vunpack.c.l.b16 %v426
    %v696 = vpack.c.b16 %v695, %v694
    %v699 = vsel %vm550, %v691, 0
    %701 = vmatpush.bf16.msra.mxu0 0
    %702 = vmatpush.bf16.msra.mxu0 0
    %703 = vmatpush.bf16.msra.mxu0 0
    %704 = vmatpush.bf16.msra.mxu0 0
    %705 = vmatpush.bf16.msra.mxu0 0
    %706 = vmatpush.bf16.msra.mxu0 0
    %707 = vmatpush.bf16.msra.mxu0 0
    %708 = vmatpush.bf16.msra.mxu0 %v696
    %709 = vmatmul.bf16.gmra.mxu0 %v699
    %v710 = vpop.f32.mrf.mxu0
    %v711 = vadd.f32 0.0, %v710
    %v712 = vpop.f32.mrf.mxu0
    %v713 = vadd.f32 0.0, %v712
    %714 = vdwg.mxu0
    %v717 = vunpack.c.l.b16 %v629
    %v718 = vunpack.c.l.b16 %v630
    %v719 = vpack.c.b16 %v718, %v717
    %v722 = vunpack.c.l.b16 %v427
    %v723 = vunpack.c.l.b16 %v428
    %v724 = vpack.c.b16 %v723, %v722
    %v727 = vsel %vm550, %v719, 0
    %729 = vmatpush.bf16.msra.mxu0 0
    %730 = vmatpush.bf16.msra.mxu0 0
    %731 = vmatpush.bf16.msra.mxu0 0
    %732 = vmatpush.bf16.msra.mxu0 0
    %733 = vmatpush.bf16.msra.mxu0 0
    %734 = vmatpush.bf16.msra.mxu0 0
    %735 = vmatpush.bf16.msra.mxu0 0
    %736 = vmatpush.bf16.msra.mxu0 %v724
    %737 = vmatmul.bf16.gmra.mxu0 %v727
    %v738 = vpop.f32.mrf.mxu0
    %v739 = vadd.f32 0.0, %v738
    %v740 = vpop.f32.mrf.mxu0
    %v741 = vadd.f32 0.0, %v740
    %742 = vdwg.mxu0
    %v743 = vrcp.pop %v601
    %v744 = vrcp.pop %v604
    %v745 = vrcp.pop %v607
    %v746 = vrcp.pop %v610
    %v747 = vrcp.pop %v613
    %v748 = vrcp.pop %v616
    %v749 = vrcp.pop %v619
    %v750 = vrcp.pop %v622
    %v751 = vmul.f32 %v655, %v743
    %v752 = vmul.f32 %v657, %v744
    %v753 = vmul.f32 %v683, %v745
    %v754 = vmul.f32 %v685, %v746
    %v755 = vmul.f32 %v711, %v747
    %v756 = vmul.f32 %v713, %v748
    %v757 = vmul.f32 %v739, %v749
    %v758 = vmul.f32 %v741, %v750
    %v759 = vpack.c.bf16 %v751, %v751
    %v760 = vpack.c.bf16 %v752, %v752
    %v761 = vpack.c.bf16 %v753, %v753
    %v762 = vpack.c.bf16 %v754, %v754
    %v763 = vpack.c.bf16 %v755, %v755
    %v764 = vpack.c.bf16 %v756, %v756
    %v765 = vpack.c.bf16 %v757, %v757
    %v766 = vpack.c.bf16 %v758, %v758
    %767 = vrot.lane.b32.xlu0 %v433, 96
    %v768 = vpop.permute.xlu0 %767
    %769 = vrot.lane.b32.xlu0 %v438, 96
    %v770 = vpop.permute.xlu0 %769
    %v772 = vsel %vm439, %v768, 0
    %v775 = vsel %vm439, %v770, 0
    %777 = vmatpush.bf16.xpose.msra.mxu0 0
    %778 = vmatpush.bf16.xpose.msra.mxu0 0
    %779 = vmatpush.bf16.xpose.msra.mxu0 0
    %780 = vmatpush.bf16.xpose.msra.mxu0 0
    %781 = vmatpush.bf16.xpose.msra.mxu0 0
    %782 = vmatpush.bf16.xpose.msra.mxu0 0
    %783 = vmatpush.bf16.xpose.msra.mxu0 0
    %784 = vmatpush.bf16.xpose.msra.mxu0 %v775
    %785 = vmatmul.bf16.gmra.mxu0 %v772
    %v786 = vpop.f32.mrf.mxu0
    %v787 = vadd.f32 0.0, %v786
    %v788 = vpop.f32.mrf.mxu0
    %v789 = vadd.f32 0.0, %v788
    %790 = vdwg.mxu0
    %791 = vrot.lane.b32.xlu0 %v464, 96
    %v792 = vpop.permute.xlu0 %791
    %793 = vrot.lane.b32.xlu0 %v469, 96
    %v794 = vpop.permute.xlu0 %793
    %v796 = vsel %vm439, %v792, 0
    %v799 = vsel %vm439, %v794, 0
    %801 = vmatpush.bf16.xpose.msra.mxu0 0
    %802 = vmatpush.bf16.xpose.msra.mxu0 0
    %803 = vmatpush.bf16.xpose.msra.mxu0 0
    %804 = vmatpush.bf16.xpose.msra.mxu0 0
    %805 = vmatpush.bf16.xpose.msra.mxu0 0
    %806 = vmatpush.bf16.xpose.msra.mxu0 0
    %807 = vmatpush.bf16.xpose.msra.mxu0 0
    %808 = vmatpush.bf16.xpose.msra.mxu0 %v799
    %809 = vmatmul.bf16.gmra.mxu0 %v796
    %v810 = vpop.f32.mrf.mxu0
    %v811 = vadd.f32 0.0, %v810
    %v812 = vpop.f32.mrf.mxu0
    %v813 = vadd.f32 0.0, %v812
    %814 = vdwg.mxu0
    %815 = vrot.lane.b32.xlu0 %v494, 96
    %v816 = vpop.permute.xlu0 %815
    %817 = vrot.lane.b32.xlu0 %v499, 96
    %v818 = vpop.permute.xlu0 %817
    %v820 = vsel %vm439, %v816, 0
    %v823 = vsel %vm439, %v818, 0
    %825 = vmatpush.bf16.xpose.msra.mxu0 0
    %826 = vmatpush.bf16.xpose.msra.mxu0 0
    %827 = vmatpush.bf16.xpose.msra.mxu0 0
    %828 = vmatpush.bf16.xpose.msra.mxu0 0
    %829 = vmatpush.bf16.xpose.msra.mxu0 0
    %830 = vmatpush.bf16.xpose.msra.mxu0 0
    %831 = vmatpush.bf16.xpose.msra.mxu0 0
    %832 = vmatpush.bf16.xpose.msra.mxu0 %v823
    %833 = vmatmul.bf16.gmra.mxu0 %v820
    %v834 = vpop.f32.mrf.mxu0
    %v835 = vadd.f32 0.0, %v834
    %v836 = vpop.f32.mrf.mxu0
    %v837 = vadd.f32 0.0, %v836
    %838 = vdwg.mxu0
    %839 = vrot.lane.b32.xlu0 %v524, 96
    %v840 = vpop.permute.xlu0 %839
    %841 = vrot.lane.b32.xlu0 %v529, 96
    %v842 = vpop.permute.xlu0 %841
    %v844 = vsel %vm439, %v840, 0
    %v847 = vsel %vm439, %v842, 0
    %849 = vmatpush.bf16.xpose.msra.mxu0 0
    %850 = vmatpush.bf16.xpose.msra.mxu0 0
    %851 = vmatpush.bf16.xpose.msra.mxu0 0
    %852 = vmatpush.bf16.xpose.msra.mxu0 0
    %853 = vmatpush.bf16.xpose.msra.mxu0 0
    %854 = vmatpush.bf16.xpose.msra.mxu0 0
    %855 = vmatpush.bf16.xpose.msra.mxu0 0
    %856 = vmatpush.bf16.xpose.msra.mxu0 %v847
    %857 = vmatmul.bf16.gmra.mxu0 %v844
    %v858 = vpop.f32.mrf.mxu0
    %v859 = vadd.f32 0.0, %v858
    %v860 = vpop.f32.mrf.mxu0
    %v861 = vadd.f32 0.0, %v860
    %862 = vdwg.mxu0
    %v863 = vsel %vm550, %v787, -inf
    %864 = vmax.xlane.f32.xlu0 %v863
    %v865 = vpop.xlane.xlu0 %864
    %v866 = vsel %vm550, %v789, -inf
    %867 = vmax.xlane.f32.xlu0 %v866
    %v868 = vpop.xlane.xlu0 %867
    %v869 = vsel %vm550, %v811, -inf
    %870 = vmax.xlane.f32.xlu0 %v869
    %v871 = vpop.xlane.xlu0 %870
    %v872 = vsel %vm550, %v813, -inf
    %873 = vmax.xlane.f32.xlu0 %v872
    %v874 = vpop.xlane.xlu0 %873
    %v875 = vsel %vm550, %v835, -inf
    %876 = vmax.xlane.f32.xlu0 %v875
    %v877 = vpop.xlane.xlu0 %876
    %v878 = vsel %vm550, %v837, -inf
    %879 = vmax.xlane.f32.xlu0 %v878
    %v880 = vpop.xlane.xlu0 %879
    %v881 = vsel %vm550, %v859, -inf
    %882 = vmax.xlane.f32.xlu0 %v881
    %v883 = vpop.xlane.xlu0 %882
    %v884 = vsel %vm550, %v861, -inf
    %885 = vmax.xlane.f32.xlu0 %v884
    %v886 = vpop.xlane.xlu0 %885
    %v887 = vsub.f32 %v787, %v865
    %v888 = vsub.f32 %v789, %v868
    %v889 = vsub.f32 %v811, %v871
    %v890 = vsub.f32 %v813, %v874
    %v891 = vsub.f32 %v835, %v877
    %v892 = vsub.f32 %v837, %v880
    %v893 = vsub.f32 %v859, %v883
    %v894 = vsub.f32 %v861, %v886
    %v895 = vmul.f32 %v887, 1.442695
    %v896 = vpow.pop %v895
    %v897 = vmul.f32 %v888, 1.442695
    %v898 = vpow.pop %v897
    %v899 = vmul.f32 %v889, 1.442695
    %v900 = vpow.pop %v899
    %v901 = vmul.f32 %v890, 1.442695
    %v902 = vpow.pop %v901
    %v903 = vmul.f32 %v891, 1.442695
    %v904 = vpow.pop %v903
    %v905 = vmul.f32 %v892, 1.442695
    %v906 = vpow.pop %v905
    %v907 = vmul.f32 %v893, 1.442695
    %v908 = vpow.pop %v907
    %v909 = vmul.f32 %v894, 1.442695
    %v910 = vpow.pop %v909
    %v911 = vsel %vm550, %v896, 0.0
    %912 = vadd.xlane.f32.xlu0 %v911
    %v913 = vpop.xlane.xlu0 %912
    %v914 = vsel %vm550, %v898, 0.0
    %915 = vadd.xlane.f32.xlu0 %v914
    %v916 = vpop.xlane.xlu0 %915
    %v917 = vsel %vm550, %v900, 0.0
    %918 = vadd.xlane.f32.xlu0 %v917
    %v919 = vpop.xlane.xlu0 %918
    %v920 = vsel %vm550, %v902, 0.0
    %921 = vadd.xlane.f32.xlu0 %v920
    %v922 = vpop.xlane.xlu0 %921
    %v923 = vsel %vm550, %v904, 0.0
    %924 = vadd.xlane.f32.xlu0 %v923
    %v925 = vpop.xlane.xlu0 %924
    %v926 = vsel %vm550, %v906, 0.0
    %927 = vadd.xlane.f32.xlu0 %v926
    %v928 = vpop.xlane.xlu0 %927
    %v929 = vsel %vm550, %v908, 0.0
    %930 = vadd.xlane.f32.xlu0 %v929
    %v931 = vpop.xlane.xlu0 %930
    %v932 = vsel %vm550, %v910, 0.0
    %933 = vadd.xlane.f32.xlu0 %v932
    %v934 = vpop.xlane.xlu0 %933
    %v935 = vpack.c.bf16 %v896, %v896
    %v936 = vpack.c.bf16 %v898, %v898
    %v937 = vpack.c.bf16 %v900, %v900
    %v938 = vpack.c.bf16 %v902, %v902
    %v939 = vpack.c.bf16 %v904, %v904
    %v940 = vpack.c.bf16 %v906, %v906
    %v941 = vpack.c.bf16 %v908, %v908
    %v942 = vpack.c.bf16 %v910, %v910
    %v945 = vunpack.c.l.b16 %v935
    %v946 = vunpack.c.l.b16 %v936
    %v947 = vpack.c.b16 %v946, %v945
    %948 = vrot.lane.b32.xlu0 %v640, 96
    %v949 = vpop.permute.xlu0 %948
    %v952 = vsel %vm550, %v947, 0
    %954 = vmatpush.bf16.msra.mxu0 0
    %955 = vmatpush.bf16.msra.mxu0 0
    %956 = vmatpush.bf16.msra.mxu0 0
    %957 = vmatpush.bf16.msra.mxu0 0
    %958 = vmatpush.bf16.msra.mxu0 0
    %959 = vmatpush.bf16.msra.mxu0 0
    %960 = vmatpush.bf16.msra.mxu0 0
    %961 = vmatpush.bf16.msra.mxu0 %v949
    %962 = vmatmul.bf16.gmra.mxu0 %v952
    %v963 = vpop.f32.mrf.mxu0
    %v964 = vadd.f32 0.0, %v963
    %v965 = vpop.f32.mrf.mxu0
    %v966 = vadd.f32 0.0, %v965
    %967 = vdwg.mxu0
    %v970 = vunpack.c.l.b16 %v937
    %v971 = vunpack.c.l.b16 %v938
    %v972 = vpack.c.b16 %v971, %v970
    %973 = vrot.lane.b32.xlu0 %v668, 96
    %v974 = vpop.permute.xlu0 %973
    %v977 = vsel %vm550, %v972, 0
    %979 = vmatpush.bf16.msra.mxu0 0
    %980 = vmatpush.bf16.msra.mxu0 0
    %981 = vmatpush.bf16.msra.mxu0 0
    %982 = vmatpush.bf16.msra.mxu0 0
    %983 = vmatpush.bf16.msra.mxu0 0
    %984 = vmatpush.bf16.msra.mxu0 0
    %985 = vmatpush.bf16.msra.mxu0 0
    %986 = vmatpush.bf16.msra.mxu0 %v974
    %987 = vmatmul.bf16.gmra.mxu0 %v977
    %v988 = vpop.f32.mrf.mxu0
    %v989 = vadd.f32 0.0, %v988
    %v990 = vpop.f32.mrf.mxu0
    %v991 = vadd.f32 0.0, %v990
    %992 = vdwg.mxu0
    %v995 = vunpack.c.l.b16 %v939
    %v996 = vunpack.c.l.b16 %v940
    %v997 = vpack.c.b16 %v996, %v995
    %998 = vrot.lane.b32.xlu0 %v696, 96
    %v999 = vpop.permute.xlu0 %998
    %v1002 = vsel %vm550, %v997, 0
    %1004 = vmatpush.bf16.msra.mxu0 0
    %1005 = vmatpush.bf16.msra.mxu0 0
    %1006 = vmatpush.bf16.msra.mxu0 0
    %1007 = vmatpush.bf16.msra.mxu0 0
    %1008 = vmatpush.bf16.msra.mxu0 0
    %1009 = vmatpush.bf16.msra.mxu0 0
    %1010 = vmatpush.bf16.msra.mxu0 0
    %1011 = vmatpush.bf16.msra.mxu0 %v999
    %1012 = vmatmul.bf16.gmra.mxu0 %v1002
    %v1013 = vpop.f32.mrf.mxu0
    %v1014 = vadd.f32 0.0, %v1013
    %v1015 = vpop.f32.mrf.mxu0
    %v1016 = vadd.f32 0.0, %v1015
    %1017 = vdwg.mxu0
    %v1020 = vunpack.c.l.b16 %v941
    %v1021 = vunpack.c.l.b16 %v942
    %v1022 = vpack.c.b16 %v1021, %v1020
    %1023 = vrot.lane.b32.xlu0 %v724, 96
    %v1024 = vpop.permute.xlu0 %1023
    %v1027 = vsel %vm550, %v1022, 0
    %1029 = vmatpush.bf16.msra.mxu0 0
    %1030 = vmatpush.bf16.msra.mxu0 0
    %1031 = vmatpush.bf16.msra.mxu0 0
    %1032 = vmatpush.bf16.msra.mxu0 0
    %1033 = vmatpush.bf16.msra.mxu0 0
    %1034 = vmatpush.bf16.msra.mxu0 0
    %1035 = vmatpush.bf16.msra.mxu0 0
    %1036 = vmatpush.bf16.msra.mxu0 %v1024
    %1037 = vmatmul.bf16.gmra.mxu0 %v1027
    %v1038 = vpop.f32.mrf.mxu0
    %v1039 = vadd.f32 0.0, %v1038
    %v1040 = vpop.f32.mrf.mxu0
    %v1041 = vadd.f32 0.0, %v1040
    %1042 = vdwg.mxu0
    %v1043 = vrcp.pop %v913
    %v1044 = vrcp.pop %v916
    %v1045 = vrcp.pop %v919
    %v1046 = vrcp.pop %v922
    %v1047 = vrcp.pop %v925
    %v1048 = vrcp.pop %v928
    %v1049 = vrcp.pop %v931
    %v1050 = vrcp.pop %v934
    %v1051 = vmul.f32 %v964, %v1043
    %v1052 = vmul.f32 %v966, %v1044
    %v1053 = vmul.f32 %v989, %v1045
    %v1054 = vmul.f32 %v991, %v1046
    %v1055 = vmul.f32 %v1014, %v1047
    %v1056 = vmul.f32 %v1016, %v1048
    %v1057 = vmul.f32 %v1039, %v1049
    %v1058 = vmul.f32 %v1041, %v1050
    %v1059 = vpack.c.bf16 %v1051, %v1051
    %v1060 = vpack.c.bf16 %v1052, %v1052
    %v1061 = vpack.c.bf16 %v1053, %v1053
    %v1062 = vpack.c.bf16 %v1054, %v1054
    %v1063 = vpack.c.bf16 %v1055, %v1055
    %v1064 = vpack.c.bf16 %v1056, %v1056
    %v1065 = vpack.c.bf16 %v1057, %v1057
    %v1066 = vpack.c.bf16 %v1058, %v1058
    %1067 = vrot.lane.b32.xlu0 %v433, 64
    %v1068 = vpop.permute.xlu0 %1067
    %1069 = vrot.lane.b32.xlu0 %v438, 64
    %v1070 = vpop.permute.xlu0 %1069
    %v1072 = vsel %vm439, %v1068, 0
    %v1075 = vsel %vm439, %v1070, 0
    %1077 = vmatpush.bf16.xpose.msra.mxu0 0
    %1078 = vmatpush.bf16.xpose.msra.mxu0 0
    %1079 = vmatpush.bf16.xpose.msra.mxu0 0
    %1080 = vmatpush.bf16.xpose.msra.mxu0 0
    %1081 = vmatpush.bf16.xpose.msra.mxu0 0
    %1082 = vmatpush.bf16.xpose.msra.mxu0 0
    %1083 = vmatpush.bf16.xpose.msra.mxu0 0
    %1084 = vmatpush.bf16.xpose.msra.mxu0 %v1075
    %1085 = vmatmul.bf16.gmra.mxu0 %v1072
    %v1086 = vpop.f32.mrf.mxu0
    %v1087 = vadd.f32 0.0, %v1086
    %v1088 = vpop.f32.mrf.mxu0
    %v1089 = vadd.f32 0.0, %v1088
    %1090 = vdwg.mxu0
    %1091 = vrot.lane.b32.xlu0 %v464, 64
    %v1092 = vpop.permute.xlu0 %1091
    %1093 = vrot.lane.b32.xlu0 %v469, 64
    %v1094 = vpop.permute.xlu0 %1093
    %v1096 = vsel %vm439, %v1092, 0
    %v1099 = vsel %vm439, %v1094, 0
    %1101 = vmatpush.bf16.xpose.msra.mxu0 0
    %1102 = vmatpush.bf16.xpose.msra.mxu0 0
    %1103 = vmatpush.bf16.xpose.msra.mxu0 0
    %1104 = vmatpush.bf16.xpose.msra.mxu0 0
    %1105 = vmatpush.bf16.xpose.msra.mxu0 0
    %1106 = vmatpush.bf16.xpose.msra.mxu0 0
    %1107 = vmatpush.bf16.xpose.msra.mxu0 0
    %1108 = vmatpush.bf16.xpose.msra.mxu0 %v1099
    %1109 = vmatmul.bf16.gmra.mxu0 %v1096
    %v1110 = vpop.f32.mrf.mxu0
    %v1111 = vadd.f32 0.0, %v1110
    %v1112 = vpop.f32.mrf.mxu0
    %v1113 = vadd.f32 0.0, %v1112
    %1114 = vdwg.mxu0
    %1115 = vrot.lane.b32.xlu0 %v494, 64
    %v1116 = vpop.permute.xlu0 %1115
    %1117 = vrot.lane.b32.xlu0 %v499, 64
    %v1118 = vpop.permute.xlu0 %1117
    %v1120 = vsel %vm439, %v1116, 0
    %v1123 = vsel %vm439, %v1118, 0
    %1125 = vmatpush.bf16.xpose.msra.mxu0 0
    %1126 = vmatpush.bf16.xpose.msra.mxu0 0
    %1127 = vmatpush.bf16.xpose.msra.mxu0 0
    %1128 = vmatpush.bf16.xpose.msra.mxu0 0
    %1129 = vmatpush.bf16.xpose.msra.mxu0 0
    %1130 = vmatpush.bf16.xpose.msra.mxu0 0
    %1131 = vmatpush.bf16.xpose.msra.mxu0 0
    %1132 = vmatpush.bf16.xpose.msra.mxu0 %v1123
    %1133 = vmatmul.bf16.gmra.mxu0 %v1120
    %v1134 = vpop.f32.mrf.mxu0
    %v1135 = vadd.f32 0.0, %v1134
    %v1136 = vpop.f32.mrf.mxu0
    %v1137 = vadd.f32 0.0, %v1136
    %1138 = vdwg.mxu0
    %1139 = vrot.lane.b32.xlu0 %v524, 64
    %v1140 = vpop.permute.xlu0 %1139
    %1141 = vrot.lane.b32.xlu0 %v529, 64
    %v1142 = vpop.permute.xlu0 %1141
    %v1144 = vsel %vm439, %v1140, 0
    %v1147 = vsel %vm439, %v1142, 0
    %1149 = vmatpush.bf16.xpose.msra.mxu0 0
    %1150 = vmatpush.bf16.xpose.msra.mxu0 0
    %1151 = vmatpush.bf16.xpose.msra.mxu0 0
    %1152 = vmatpush.bf16.xpose.msra.mxu0 0
    %1153 = vmatpush.bf16.xpose.msra.mxu0 0
    %1154 = vmatpush.bf16.xpose.msra.mxu0 0
    %1155 = vmatpush.bf16.xpose.msra.mxu0 0
    %1156 = vmatpush.bf16.xpose.msra.mxu0 %v1147
    %1157 = vmatmul.bf16.gmra.mxu0 %v1144
    %v1158 = vpop.f32.mrf.mxu0
    %v1159 = vadd.f32 0.0, %v1158
    %v1160 = vpop.f32.mrf.mxu0
    %v1161 = vadd.f32 0.0, %v1160
    %1162 = vdwg.mxu0
    %v1163 = vsel %vm550, %v1087, -inf
    %1164 = vmax.xlane.f32.xlu0 %v1163
    %v1165 = vpop.xlane.xlu0 %1164
    %v1166 = vsel %vm550, %v1089, -inf
    %1167 = vmax.xlane.f32.xlu0 %v1166
    %v1168 = vpop.xlane.xlu0 %1167
    %v1169 = vsel %vm550, %v1111, -inf
    %1170 = vmax.xlane.f32.xlu0 %v1169
    %v1171 = vpop.xlane.xlu0 %1170
    %v1172 = vsel %vm550, %v1113, -inf
    %1173 = vmax.xlane.f32.xlu0 %v1172
    %v1174 = vpop.xlane.xlu0 %1173
    %v1175 = vsel %vm550, %v1135, -inf
    %1176 = vmax.xlane.f32.xlu0 %v1175
    %v1177 = vpop.xlane.xlu0 %1176
    %v1178 = vsel %vm550, %v1137, -inf
    %1179 = vmax.xlane.f32.xlu0 %v1178
    %v1180 = vpop.xlane.xlu0 %1179
    %v1181 = vsel %vm550, %v1159, -inf
    %1182 = vmax.xlane.f32.xlu0 %v1181
    %v1183 = vpop.xlane.xlu0 %1182
    %v1184 = vsel %vm550, %v1161, -inf
    %1185 = vmax.xlane.f32.xlu0 %v1184
    %v1186 = vpop.xlane.xlu0 %1185
    %v1187 = vsub.f32 %v1087, %v1165
    %v1188 = vsub.f32 %v1089, %v1168
    %v1189 = vsub.f32 %v1111, %v1171
    %v1190 = vsub.f32 %v1113, %v1174
    %v1191 = vsub.f32 %v1135, %v1177
    %v1192 = vsub.f32 %v1137, %v1180
    %v1193 = vsub.f32 %v1159, %v1183
    %v1194 = vsub.f32 %v1161, %v1186
    %v1195 = vmul.f32 %v1187, 1.442695
    %v1196 = vpow.pop %v1195
    %v1197 = vmul.f32 %v1188, 1.442695
    %v1198 = vpow.pop %v1197
    %v1199 = vmul.f32 %v1189, 1.442695
    %v1200 = vpow.pop %v1199
    %v1201 = vmul.f32 %v1190, 1.442695
    %v1202 = vpow.pop %v1201
    %v1203 = vmul.f32 %v1191, 1.442695
    %v1204 = vpow.pop %v1203
    %v1205 = vmul.f32 %v1192, 1.442695
    %v1206 = vpow.pop %v1205
    %v1207 = vmul.f32 %v1193, 1.442695
    %v1208 = vpow.pop %v1207
    %v1209 = vmul.f32 %v1194, 1.442695
    %v1210 = vpow.pop %v1209
    %v1211 = vsel %vm550, %v1196, 0.0
    %1212 = vadd.xlane.f32.xlu0 %v1211
    %v1213 = vpop.xlane.xlu0 %1212
    %v1214 = vsel %vm550, %v1198, 0.0
    %1215 = vadd.xlane.f32.xlu0 %v1214
    %v1216 = vpop.xlane.xlu0 %1215
    %v1217 = vsel %vm550, %v1200, 0.0
    %1218 = vadd.xlane.f32.xlu0 %v1217
    %v1219 = vpop.xlane.xlu0 %1218
    %v1220 = vsel %vm550, %v1202, 0.0
    %1221 = vadd.xlane.f32.xlu0 %v1220
    %v1222 = vpop.xlane.xlu0 %1221
    %v1223 = vsel %vm550, %v1204, 0.0
    %1224 = vadd.xlane.f32.xlu0 %v1223
    %v1225 = vpop.xlane.xlu0 %1224
    %v1226 = vsel %vm550, %v1206, 0.0
    %1227 = vadd.xlane.f32.xlu0 %v1226
    %v1228 = vpop.xlane.xlu0 %1227
    %v1229 = vsel %vm550, %v1208, 0.0
    %1230 = vadd.xlane.f32.xlu0 %v1229
    %v1231 = vpop.xlane.xlu0 %1230
    %v1232 = vsel %vm550, %v1210, 0.0
    %1233 = vadd.xlane.f32.xlu0 %v1232
    %v1234 = vpop.xlane.xlu0 %1233
    %v1235 = vpack.c.bf16 %v1196, %v1196
    %v1236 = vpack.c.bf16 %v1198, %v1198
    %v1237 = vpack.c.bf16 %v1200, %v1200
    %v1238 = vpack.c.bf16 %v1202, %v1202
    %v1239 = vpack.c.bf16 %v1204, %v1204
    %v1240 = vpack.c.bf16 %v1206, %v1206
    %v1241 = vpack.c.bf16 %v1208, %v1208
    %v1242 = vpack.c.bf16 %v1210, %v1210
    %v1245 = vunpack.c.l.b16 %v1235
    %v1246 = vunpack.c.l.b16 %v1236
    %v1247 = vpack.c.b16 %v1246, %v1245
    %1248 = vrot.lane.b32.xlu0 %v640, 64
    %v1249 = vpop.permute.xlu0 %1248
    %v1252 = vsel %vm550, %v1247, 0
    %1254 = vmatpush.bf16.msra.mxu0 0
    %1255 = vmatpush.bf16.msra.mxu0 0
    %1256 = vmatpush.bf16.msra.mxu0 0
    %1257 = vmatpush.bf16.msra.mxu0 0
    %1258 = vmatpush.bf16.msra.mxu0 0
    %1259 = vmatpush.bf16.msra.mxu0 0
    %1260 = vmatpush.bf16.msra.mxu0 0
    %1261 = vmatpush.bf16.msra.mxu0 %v1249
    %1262 = vmatmul.bf16.gmra.mxu0 %v1252
    %v1263 = vpop.f32.mrf.mxu0
    %v1264 = vadd.f32 0.0, %v1263
    %v1265 = vpop.f32.mrf.mxu0
    %v1266 = vadd.f32 0.0, %v1265
    %1267 = vdwg.mxu0
    %v1270 = vunpack.c.l.b16 %v1237
    %v1271 = vunpack.c.l.b16 %v1238
    %v1272 = vpack.c.b16 %v1271, %v1270
    %1273 = vrot.lane.b32.xlu0 %v668, 64
    %v1274 = vpop.permute.xlu0 %1273
    %v1277 = vsel %vm550, %v1272, 0
    %1279 = vmatpush.bf16.msra.mxu0 0
    %1280 = vmatpush.bf16.msra.mxu0 0
    %1281 = vmatpush.bf16.msra.mxu0 0
    %1282 = vmatpush.bf16.msra.mxu0 0
    %1283 = vmatpush.bf16.msra.mxu0 0
    %1284 = vmatpush.bf16.msra.mxu0 0
    %1285 = vmatpush.bf16.msra.mxu0 0
    %1286 = vmatpush.bf16.msra.mxu0 %v1274
    %1287 = vmatmul.bf16.gmra.mxu0 %v1277
    %v1288 = vpop.f32.mrf.mxu0
    %v1289 = vadd.f32 0.0, %v1288
    %v1290 = vpop.f32.mrf.mxu0
    %v1291 = vadd.f32 0.0, %v1290
    %1292 = vdwg.mxu0
    %v1295 = vunpack.c.l.b16 %v1239
    %v1296 = vunpack.c.l.b16 %v1240
    %v1297 = vpack.c.b16 %v1296, %v1295
    %1298 = vrot.lane.b32.xlu0 %v696, 64
    %v1299 = vpop.permute.xlu0 %1298
    %v1302 = vsel %vm550, %v1297, 0
    %1304 = vmatpush.bf16.msra.mxu0 0
    %1305 = vmatpush.bf16.msra.mxu0 0
    %1306 = vmatpush.bf16.msra.mxu0 0
    %1307 = vmatpush.bf16.msra.mxu0 0
    %1308 = vmatpush.bf16.msra.mxu0 0
    %1309 = vmatpush.bf16.msra.mxu0 0
    %1310 = vmatpush.bf16.msra.mxu0 0
    %1311 = vmatpush.bf16.msra.mxu0 %v1299
    %1312 = vmatmul.bf16.gmra.mxu0 %v1302
    %v1313 = vpop.f32.mrf.mxu0
    %v1314 = vadd.f32 0.0, %v1313
    %v1315 = vpop.f32.mrf.mxu0
    %v1316 = vadd.f32 0.0, %v1315
    %1317 = vdwg.mxu0
    %v1320 = vunpack.c.l.b16 %v1241
    %v1321 = vunpack.c.l.b16 %v1242
    %v1322 = vpack.c.b16 %v1321, %v1320
    %1323 = vrot.lane.b32.xlu0 %v724, 64
    %v1324 = vpop.permute.xlu0 %1323
    %v1327 = vsel %vm550, %v1322, 0
    %1329 = vmatpush.bf16.msra.mxu0 0
    %1330 = vmatpush.bf16.msra.mxu0 0
    %1331 = vmatpush.bf16.msra.mxu0 0
    %1332 = vmatpush.bf16.msra.mxu0 0
    %1333 = vmatpush.bf16.msra.mxu0 0
    %1334 = vmatpush.bf16.msra.mxu0 0
    %1335 = vmatpush.bf16.msra.mxu0 0
    %1336 = vmatpush.bf16.msra.mxu0 %v1324
    %1337 = vmatmul.bf16.gmra.mxu0 %v1327
    %v1338 = vpop.f32.mrf.mxu0
    %v1339 = vadd.f32 0.0, %v1338
    %v1340 = vpop.f32.mrf.mxu0
    %v1341 = vadd.f32 0.0, %v1340
    %1342 = vdwg.mxu0
    %v1343 = vrcp.pop %v1213
    %v1344 = vrcp.pop %v1216
    %v1345 = vrcp.pop %v1219
    %v1346 = vrcp.pop %v1222
    %v1347 = vrcp.pop %v1225
    %v1348 = vrcp.pop %v1228
    %v1349 = vrcp.pop %v1231
    %v1350 = vrcp.pop %v1234
    %v1351 = vmul.f32 %v1264, %v1343
    %v1352 = vmul.f32 %v1266, %v1344
    %v1353 = vmul.f32 %v1289, %v1345
    %v1354 = vmul.f32 %v1291, %v1346
    %v1355 = vmul.f32 %v1314, %v1347
    %v1356 = vmul.f32 %v1316, %v1348
    %v1357 = vmul.f32 %v1339, %v1349
    %v1358 = vmul.f32 %v1341, %v1350
    %v1359 = vpack.c.bf16 %v1351, %v1351
    %v1360 = vpack.c.bf16 %v1352, %v1352
    %v1361 = vpack.c.bf16 %v1353, %v1353
    %v1362 = vpack.c.bf16 %v1354, %v1354
    %v1363 = vpack.c.bf16 %v1355, %v1355
    %v1364 = vpack.c.bf16 %v1356, %v1356
    %v1365 = vpack.c.bf16 %v1357, %v1357
    %v1366 = vpack.c.bf16 %v1358, %v1358
    %1367 = vrot.lane.b32.xlu0 %v433, 32
    %v1368 = vpop.permute.xlu0 %1367
    %1369 = vrot.lane.b32.xlu0 %v438, 32
    %v1370 = vpop.permute.xlu0 %1369
    %v1372 = vsel %vm439, %v1368, 0
    %v1375 = vsel %vm439, %v1370, 0
    %1377 = vmatpush.bf16.xpose.msra.mxu0 0
    %1378 = vmatpush.bf16.xpose.msra.mxu0 0
    %1379 = vmatpush.bf16.xpose.msra.mxu0 0
    %1380 = vmatpush.bf16.xpose.msra.mxu0 0
    %1381 = vmatpush.bf16.xpose.msra.mxu0 0
    %1382 = vmatpush.bf16.xpose.msra.mxu0 0
    %1383 = vmatpush.bf16.xpose.msra.mxu0 0
    %1384 = vmatpush.bf16.xpose.msra.mxu0 %v1375
    %1385 = vmatmul.bf16.gmra.mxu0 %v1372
    %v1386 = vpop.f32.mrf.mxu0
    %v1387 = vadd.f32 0.0, %v1386
    %v1388 = vpop.f32.mrf.mxu0
    %v1389 = vadd.f32 0.0, %v1388
    %1390 = vdwg.mxu0
    %1391 = vrot.lane.b32.xlu0 %v464, 32
    %v1392 = vpop.permute.xlu0 %1391
    %1393 = vrot.lane.b32.xlu0 %v469, 32
    %v1394 = vpop.permute.xlu0 %1393
    %v1396 = vsel %vm439, %v1392, 0
    %v1399 = vsel %vm439, %v1394, 0
    %1401 = vmatpush.bf16.xpose.msra.mxu0 0
    %1402 = vmatpush.bf16.xpose.msra.mxu0 0
    %1403 = vmatpush.bf16.xpose.msra.mxu0 0
    %1404 = vmatpush.bf16.xpose.msra.mxu0 0
    %1405 = vmatpush.bf16.xpose.msra.mxu0 0
    %1406 = vmatpush.bf16.xpose.msra.mxu0 0
    %1407 = vmatpush.bf16.xpose.msra.mxu0 0
    %1408 = vmatpush.bf16.xpose.msra.mxu0 %v1399
    %1409 = vmatmul.bf16.gmra.mxu0 %v1396
    %v1410 = vpop.f32.mrf.mxu0
    %v1411 = vadd.f32 0.0, %v1410
    %v1412 = vpop.f32.mrf.mxu0
    %v1413 = vadd.f32 0.0, %v1412
    %1414 = vdwg.mxu0
    %1415 = vrot.lane.b32.xlu0 %v494, 32
    %v1416 = vpop.permute.xlu0 %1415
    %1417 = vrot.lane.b32.xlu0 %v499, 32
    %v1418 = vpop.permute.xlu0 %1417
    %v1420 = vsel %vm439, %v1416, 0
    %v1423 = vsel %vm439, %v1418, 0
    %1425 = vmatpush.bf16.xpose.msra.mxu0 0
    %1426 = vmatpush.bf16.xpose.msra.mxu0 0
    %1427 = vmatpush.bf16.xpose.msra.mxu0 0
    %1428 = vmatpush.bf16.xpose.msra.mxu0 0
    %1429 = vmatpush.bf16.xpose.msra.mxu0 0
    %1430 = vmatpush.bf16.xpose.msra.mxu0 0
    %1431 = vmatpush.bf16.xpose.msra.mxu0 0
    %1432 = vmatpush.bf16.xpose.msra.mxu0 %v1423
    %1433 = vmatmul.bf16.gmra.mxu0 %v1420
    %v1434 = vpop.f32.mrf.mxu0
    %v1435 = vadd.f32 0.0, %v1434
    %v1436 = vpop.f32.mrf.mxu0
    %v1437 = vadd.f32 0.0, %v1436
    %1438 = vdwg.mxu0
    %1439 = vrot.lane.b32.xlu0 %v524, 32
    %v1440 = vpop.permute.xlu0 %1439
    %1441 = vrot.lane.b32.xlu0 %v529, 32
    %v1442 = vpop.permute.xlu0 %1441
    %v1444 = vsel %vm439, %v1440, 0
    %v1447 = vsel %vm439, %v1442, 0
    %1449 = vmatpush.bf16.xpose.msra.mxu0 0
    %1450 = vmatpush.bf16.xpose.msra.mxu0 0
    %1451 = vmatpush.bf16.xpose.msra.mxu0 0
    %1452 = vmatpush.bf16.xpose.msra.mxu0 0
    %1453 = vmatpush.bf16.xpose.msra.mxu0 0
    %1454 = vmatpush.bf16.xpose.msra.mxu0 0
    %1455 = vmatpush.bf16.xpose.msra.mxu0 0
    %1456 = vmatpush.bf16.xpose.msra.mxu0 %v1447
    %1457 = vmatmul.bf16.gmra.mxu0 %v1444
    %v1458 = vpop.f32.mrf.mxu0
    %v1459 = vadd.f32 0.0, %v1458
    %v1460 = vpop.f32.mrf.mxu0
    %v1461 = vadd.f32 0.0, %v1460
    %1462 = vdwg.mxu0
    %v1463 = vsel %vm550, %v1387, -inf
    %1464 = vmax.xlane.f32.xlu0 %v1463
    %v1465 = vpop.xlane.xlu0 %1464
    %v1466 = vsel %vm550, %v1389, -inf
    %1467 = vmax.xlane.f32.xlu0 %v1466
    %v1468 = vpop.xlane.xlu0 %1467
    %v1469 = vsel %vm550, %v1411, -inf
    %1470 = vmax.xlane.f32.xlu0 %v1469
    %v1471 = vpop.xlane.xlu0 %1470
    %v1472 = vsel %vm550, %v1413, -inf
    %1473 = vmax.xlane.f32.xlu0 %v1472
    %v1474 = vpop.xlane.xlu0 %1473
    %v1475 = vsel %vm550, %v1435, -inf
    %1476 = vmax.xlane.f32.xlu0 %v1475
    %v1477 = vpop.xlane.xlu0 %1476
    %v1478 = vsel %vm550, %v1437, -inf
    %1479 = vmax.xlane.f32.xlu0 %v1478
    %v1480 = vpop.xlane.xlu0 %1479
    %v1481 = vsel %vm550, %v1459, -inf
    %1482 = vmax.xlane.f32.xlu0 %v1481
    %v1483 = vpop.xlane.xlu0 %1482
    %v1484 = vsel %vm550, %v1461, -inf
    %1485 = vmax.xlane.f32.xlu0 %v1484
    %v1486 = vpop.xlane.xlu0 %1485
    %v1487 = vsub.f32 %v1387, %v1465
    %v1488 = vsub.f32 %v1389, %v1468
    %v1489 = vsub.f32 %v1411, %v1471
    %v1490 = vsub.f32 %v1413, %v1474
    %v1491 = vsub.f32 %v1435, %v1477
    %v1492 = vsub.f32 %v1437, %v1480
    %v1493 = vsub.f32 %v1459, %v1483
    %v1494 = vsub.f32 %v1461, %v1486
    %v1495 = vmul.f32 %v1487, 1.442695
    %v1496 = vpow.pop %v1495
    %v1497 = vmul.f32 %v1488, 1.442695
    %v1498 = vpow.pop %v1497
    %v1499 = vmul.f32 %v1489, 1.442695
    %v1500 = vpow.pop %v1499
    %v1501 = vmul.f32 %v1490, 1.442695
    %v1502 = vpow.pop %v1501
    %v1503 = vmul.f32 %v1491, 1.442695
    %v1504 = vpow.pop %v1503
    %v1505 = vmul.f32 %v1492, 1.442695
    %v1506 = vpow.pop %v1505
    %v1507 = vmul.f32 %v1493, 1.442695
    %v1508 = vpow.pop %v1507
    %v1509 = vmul.f32 %v1494, 1.442695
    %v1510 = vpow.pop %v1509
    %v1511 = vsel %vm550, %v1496, 0.0
    %1512 = vadd.xlane.f32.xlu0 %v1511
    %v1513 = vpop.xlane.xlu0 %1512
    %v1514 = vsel %vm550, %v1498, 0.0
    %1515 = vadd.xlane.f32.xlu0 %v1514
    %v1516 = vpop.xlane.xlu0 %1515
    %v1517 = vsel %vm550, %v1500, 0.0
    %1518 = vadd.xlane.f32.xlu0 %v1517
    %v1519 = vpop.xlane.xlu0 %1518
    %v1520 = vsel %vm550, %v1502, 0.0
    %1521 = vadd.xlane.f32.xlu0 %v1520
    %v1522 = vpop.xlane.xlu0 %1521
    %v1523 = vsel %vm550, %v1504, 0.0
    %1524 = vadd.xlane.f32.xlu0 %v1523
    %v1525 = vpop.xlane.xlu0 %1524
    %v1526 = vsel %vm550, %v1506, 0.0
    %1527 = vadd.xlane.f32.xlu0 %v1526
    %v1528 = vpop.xlane.xlu0 %1527
    %v1529 = vsel %vm550, %v1508, 0.0
    %1530 = vadd.xlane.f32.xlu0 %v1529
    %v1531 = vpop.xlane.xlu0 %1530
    %v1532 = vsel %vm550, %v1510, 0.0
    %1533 = vadd.xlane.f32.xlu0 %v1532
    %v1534 = vpop.xlane.xlu0 %1533
    %v1535 = vpack.c.bf16 %v1496, %v1496
    %v1536 = vpack.c.bf16 %v1498, %v1498
    %v1537 = vpack.c.bf16 %v1500, %v1500
    %v1538 = vpack.c.bf16 %v1502, %v1502
    %v1539 = vpack.c.bf16 %v1504, %v1504
    %v1540 = vpack.c.bf16 %v1506, %v1506
    %v1541 = vpack.c.bf16 %v1508, %v1508
    %v1542 = vpack.c.bf16 %v1510, %v1510
    %v1545 = vunpack.c.l.b16 %v1535
    %v1546 = vunpack.c.l.b16 %v1536
    %v1547 = vpack.c.b16 %v1546, %v1545
    %1548 = vrot.lane.b32.xlu0 %v640, 32
    %v1549 = vpop.permute.xlu0 %1548
    %v1552 = vsel %vm550, %v1547, 0
    %1554 = vmatpush.bf16.msra.mxu0 0
    %1555 = vmatpush.bf16.msra.mxu0 0
    %1556 = vmatpush.bf16.msra.mxu0 0
    %1557 = vmatpush.bf16.msra.mxu0 0
    %1558 = vmatpush.bf16.msra.mxu0 0
    %1559 = vmatpush.bf16.msra.mxu0 0
    %1560 = vmatpush.bf16.msra.mxu0 0
    %1561 = vmatpush.bf16.msra.mxu0 %v1549
    %1562 = vmatmul.bf16.gmra.mxu0 %v1552
    %v1563 = vpop.f32.mrf.mxu0
    %v1564 = vadd.f32 0.0, %v1563
    %v1565 = vpop.f32.mrf.mxu0
    %v1566 = vadd.f32 0.0, %v1565
    %1567 = vdwg.mxu0
    %v1570 = vunpack.c.l.b16 %v1537
    %v1571 = vunpack.c.l.b16 %v1538
    %v1572 = vpack.c.b16 %v1571, %v1570
    %1573 = vrot.lane.b32.xlu0 %v668, 32
    %v1574 = vpop.permute.xlu0 %1573
    %v1577 = vsel %vm550, %v1572, 0
    %1579 = vmatpush.bf16.msra.mxu0 0
    %1580 = vmatpush.bf16.msra.mxu0 0
    %1581 = vmatpush.bf16.msra.mxu0 0
    %1582 = vmatpush.bf16.msra.mxu0 0
    %1583 = vmatpush.bf16.msra.mxu0 0
    %1584 = vmatpush.bf16.msra.mxu0 0
    %1585 = vmatpush.bf16.msra.mxu0 0
    %1586 = vmatpush.bf16.msra.mxu0 %v1574
    %1587 = vmatmul.bf16.gmra.mxu0 %v1577
    %v1588 = vpop.f32.mrf.mxu0
    %v1589 = vadd.f32 0.0, %v1588
    %v1590 = vpop.f32.mrf.mxu0
    %v1591 = vadd.f32 0.0, %v1590
    %1592 = vdwg.mxu0
    %v1595 = vunpack.c.l.b16 %v1539
    %v1596 = vunpack.c.l.b16 %v1540
    %v1597 = vpack.c.b16 %v1596, %v1595
    %1598 = vrot.lane.b32.xlu0 %v696, 32
    %v1599 = vpop.permute.xlu0 %1598
    %v1602 = vsel %vm550, %v1597, 0
    %1604 = vmatpush.bf16.msra.mxu0 0
    %1605 = vmatpush.bf16.msra.mxu0 0
    %1606 = vmatpush.bf16.msra.mxu0 0
    %1607 = vmatpush.bf16.msra.mxu0 0
    %1608 = vmatpush.bf16.msra.mxu0 0
    %1609 = vmatpush.bf16.msra.mxu0 0
    %1610 = vmatpush.bf16.msra.mxu0 0
    %1611 = vmatpush.bf16.msra.mxu0 %v1599
    %1612 = vmatmul.bf16.gmra.mxu0 %v1602
    %v1613 = vpop.f32.mrf.mxu0
    %v1614 = vadd.f32 0.0, %v1613
    %v1615 = vpop.f32.mrf.mxu0
    %v1616 = vadd.f32 0.0, %v1615
    %1617 = vdwg.mxu0
    %v1620 = vunpack.c.l.b16 %v1541
    %v1621 = vunpack.c.l.b16 %v1542
    %v1622 = vpack.c.b16 %v1621, %v1620
    %1623 = vrot.lane.b32.xlu0 %v724, 32
    %v1624 = vpop.permute.xlu0 %1623
    %v1627 = vsel %vm550, %v1622, 0
    %1629 = vmatpush.bf16.msra.mxu0 0
    %1630 = vmatpush.bf16.msra.mxu0 0
    %1631 = vmatpush.bf16.msra.mxu0 0
    %1632 = vmatpush.bf16.msra.mxu0 0
    %1633 = vmatpush.bf16.msra.mxu0 0
    %1634 = vmatpush.bf16.msra.mxu0 0
    %1635 = vmatpush.bf16.msra.mxu0 0
    %1636 = vmatpush.bf16.msra.mxu0 %v1624
    %1637 = vmatmul.bf16.gmra.mxu0 %v1627
    %v1638 = vpop.f32.mrf.mxu0
    %v1639 = vadd.f32 0.0, %v1638
    %v1640 = vpop.f32.mrf.mxu0
    %v1641 = vadd.f32 0.0, %v1640
    %1642 = vdwg.mxu0
    %v1643 = vrcp.pop %v1513
    %v1644 = vrcp.pop %v1516
    %v1645 = vrcp.pop %v1519
    %v1646 = vrcp.pop %v1522
    %v1647 = vrcp.pop %v1525
    %v1648 = vrcp.pop %v1528
    %v1649 = vrcp.pop %v1531
    %v1650 = vrcp.pop %v1534
    %v1651 = vmul.f32 %v1564, %v1643
    %v1652 = vmul.f32 %v1566, %v1644
    %v1653 = vmul.f32 %v1589, %v1645
    %v1654 = vmul.f32 %v1591, %v1646
    %v1655 = vmul.f32 %v1614, %v1647
    %v1656 = vmul.f32 %v1616, %v1648
    %v1657 = vmul.f32 %v1639, %v1649
    %v1658 = vmul.f32 %v1641, %v1650
    %v1659 = vpack.c.bf16 %v1651, %v1651
    %v1660 = vpack.c.bf16 %v1652, %v1652
    %v1661 = vpack.c.bf16 %v1653, %v1653
    %v1662 = vpack.c.bf16 %v1654, %v1654
    %v1663 = vpack.c.bf16 %v1655, %v1655
    %v1664 = vpack.c.bf16 %v1656, %v1656
    %v1665 = vpack.c.bf16 %v1657, %v1657
    %v1666 = vpack.c.bf16 %v1658, %v1658
    %v1675 = vunpack.c.l.b16 %v759
    %v1676 = vunpack.c.l.b16 %v760
    %v1677 = vunpack.c.l.b16 %v761
    %v1678 = vunpack.c.l.b16 %v762
    %v1679 = vunpack.c.l.b16 %v763
    %v1680 = vunpack.c.l.b16 %v764
    %v1681 = vunpack.c.l.b16 %v765
    %v1682 = vunpack.c.l.b16 %v766
    %v1683 = vpack.c.b16 %v1676, %v1675
    %v1684 = vpack.c.b16 %v1678, %v1677
    %v1685 = vpack.c.b16 %v1680, %v1679
    %v1686 = vpack.c.b16 %v1682, %v1681
    %v1695 = vunpack.c.l.b16 %v1059
    %v1696 = vunpack.c.l.b16 %v1060
    %v1697 = vunpack.c.l.b16 %v1061
    %v1698 = vunpack.c.l.b16 %v1062
    %v1699 = vunpack.c.l.b16 %v1063
    %v1700 = vunpack.c.l.b16 %v1064
    %v1701 = vunpack.c.l.b16 %v1065
    %v1702 = vunpack.c.l.b16 %v1066
    %v1703 = vpack.c.b16 %v1696, %v1695
    %v1704 = vpack.c.b16 %v1698, %v1697
    %v1705 = vpack.c.b16 %v1700, %v1699
    %v1706 = vpack.c.b16 %v1702, %v1701
    %1707 = vrot.lane.b32.xlu0 %v1703, 32
    %v1708 = vpop.permute.xlu0 %1707
    %1709 = vrot.lane.b32.xlu0 %v1704, 32
    %v1710 = vpop.permute.xlu0 %1709
    %1711 = vrot.lane.b32.xlu0 %v1705, 32
    %v1712 = vpop.permute.xlu0 %1711
    %1713 = vrot.lane.b32.xlu0 %v1706, 32
    %v1714 = vpop.permute.xlu0 %1713
    %v1723 = vunpack.c.l.b16 %v1359
    %v1724 = vunpack.c.l.b16 %v1360
    %v1725 = vunpack.c.l.b16 %v1361
    %v1726 = vunpack.c.l.b16 %v1362
    %v1727 = vunpack.c.l.b16 %v1363
    %v1728 = vunpack.c.l.b16 %v1364
    %v1729 = vunpack.c.l.b16 %v1365
    %v1730 = vunpack.c.l.b16 %v1366
    %v1731 = vpack.c.b16 %v1724, %v1723
    %v1732 = vpack.c.b16 %v1726, %v1725
    %v1733 = vpack.c.b16 %v1728, %v1727
    %v1734 = vpack.c.b16 %v1730, %v1729
    %1735 = vrot.lane.b32.xlu0 %v1731, 64
    %v1736 = vpop.permute.xlu0 %1735
    %1737 = vrot.lane.b32.xlu0 %v1732, 64
    %v1738 = vpop.permute.xlu0 %1737
    %1739 = vrot.lane.b32.xlu0 %v1733, 64
    %v1740 = vpop.permute.xlu0 %1739
    %1741 = vrot.lane.b32.xlu0 %v1734, 64
    %v1742 = vpop.permute.xlu0 %1741
    %v1751 = vunpack.c.l.b16 %v1659
    %v1752 = vunpack.c.l.b16 %v1660
    %v1753 = vunpack.c.l.b16 %v1661
    %v1754 = vunpack.c.l.b16 %v1662
    %v1755 = vunpack.c.l.b16 %v1663
    %v1756 = vunpack.c.l.b16 %v1664
    %v1757 = vunpack.c.l.b16 %v1665
    %v1758 = vunpack.c.l.b16 %v1666
    %v1759 = vpack.c.b16 %v1752, %v1751
    %v1760 = vpack.c.b16 %v1754, %v1753
    %v1761 = vpack.c.b16 %v1756, %v1755
    %v1762 = vpack.c.b16 %v1758, %v1757
    %1763 = vrot.lane.b32.xlu0 %v1759, 96
    %v1764 = vpop.permute.xlu0 %1763
    %1765 = vrot.lane.b32.xlu0 %v1760, 96
    %v1766 = vpop.permute.xlu0 %1765
    %1767 = vrot.lane.b32.xlu0 %v1761, 96
    %v1768 = vpop.permute.xlu0 %1767
    %1769 = vrot.lane.b32.xlu0 %v1762, 96
    %v1770 = vpop.permute.xlu0 %1769
    %v1773 = vsel %vm439, %v1683, %v1708
    %v1776 = vsel %vm439, %v1684, %v1710
    %v1779 = vsel %vm439, %v1685, %v1712
    %v1782 = vsel %vm439, %v1686, %v1714
    %vm1783 = vcmask 523264
    %v1785 = vsel %vm1783, %v1773, %v1736
    %v1787 = vsel %vm1783, %v1776, %v1738
    %v1789 = vsel %vm1783, %v1779, %v1740
    %v1791 = vsel %vm1783, %v1782, %v1742
    %vm1792 = vcmask 785408
    %v1794 = vsel %vm1792, %v1785, %v1764
    %v1797 = vsel %vm1792, %v1787, %v1766
    %v1800 = vsel %vm1792, %v1789, %v1768
    %v1803 = vsel %vm1792, %v1791, %v1770
    %v1805 = vld [vmem:[#allocation8] sm:$0xf]
    %v1806 = vld [vmem:[#allocation8 + $0x4] sm:$0xf]
    %v1807 = vld [vmem:[#allocation8 + $0x8] sm:$0xf]
    %v1808 = vld [vmem:[#allocation8 + $0xc] sm:$0xf]
    %v1809 = vld [vmem:[#allocation8 + $0x10] sm:$0xf]
    %v1810 = vld [vmem:[#allocation8 + $0x14] sm:$0xf]
    %v1811 = vld [vmem:[#allocation8 + $0x18] sm:$0xf]
    %v1812 = vld [vmem:[#allocation8 + $0x1c] sm:$0xf]
    %v1813 = vld [vmem:[#allocation8 + $0x20] sm:$0xf]
    %v1814 = vld [vmem:[#allocation8 + $0x24] sm:$0xf]
    %v1815 = vld [vmem:[#allocation8 + $0x28] sm:$0xf]
    %v1816 = vld [vmem:[#allocation8 + $0x2c] sm:$0xf]
    %v1817 = vld [vmem:[#allocation8 + $0x30] sm:$0xf]
    %v1818 = vld [vmem:[#allocation8 + $0x34] sm:$0xf]
    %v1819 = vld [vmem:[#allocation8 + $0x38] sm:$0xf]
    %v1820 = vld [vmem:[#allocation8 + $0x3c] sm:$0xf]
    %v1821 = vld [vmem:[%s4] sm:$0x1]
    %v1823 = vperm.slane %v1821, 0
    %v1841 = vunpack.c.l.b16 %v1805
    %v1842 = vunpack.c.l.b16 %v1806
    %v1843 = vunpack.c.l.b16 %v1807
    %v1844 = vunpack.c.l.b16 %v1808
    %v1845 = vunpack.c.l.b16 %v1809
    %v1846 = vunpack.c.l.b16 %v1810
    %v1847 = vunpack.c.l.b16 %v1811
    %v1848 = vunpack.c.l.b16 %v1812
    %v1849 = vunpack.c.l.b16 %v1813
    %v1850 = vunpack.c.l.b16 %v1814
    %v1851 = vunpack.c.l.b16 %v1815
    %v1852 = vunpack.c.l.b16 %v1816
    %v1853 = vunpack.c.l.b16 %v1817
    %v1854 = vunpack.c.l.b16 %v1818
    %v1855 = vunpack.c.l.b16 %v1819
    %v1856 = vunpack.c.l.b16 %v1820
    %v1857 = vpack.c.b16 %v1842, %v1841
    %v1858 = vpack.c.b16 %v1844, %v1843
    %v1859 = vpack.c.b16 %v1846, %v1845
    %v1860 = vpack.c.b16 %v1848, %v1847
    %v1861 = vpack.c.b16 %v1850, %v1849
    %v1862 = vpack.c.b16 %v1852, %v1851
    %v1863 = vpack.c.b16 %v1854, %v1853
    %v1864 = vpack.c.b16 %v1856, %v1855
    %1873 = vmatpush.bf16.msra.mxu0 %v1864
    %1874 = vmatpush.bf16.msra.mxu0 %v1863
    %1875 = vmatpush.bf16.msra.mxu0 %v1862
    %1876 = vmatpush.bf16.msra.mxu0 %v1861
    %1877 = vmatpush.bf16.msra.mxu0 %v1860
    %1878 = vmatpush.bf16.msra.mxu0 %v1859
    %1879 = vmatpush.bf16.msra.mxu0 %v1858
    %1880 = vmatpush.bf16.msra.mxu0 %v1857
    %1881 = vmatmul.bf16.gmra.mxu0 %v1794
    %v1882 = vpop.f32.mrf.mxu0
    %v1883 = vadd.f32 %v1823, %v1882
    %v1884 = vpop.f32.mrf.mxu0
    %v1885 = vadd.f32 %v1823, %v1884
    %1886 = vmatmul.bf16.gmra.mxu0 %v1797
    %v1887 = vpop.f32.mrf.mxu0
    %v1888 = vadd.f32 %v1823, %v1887
    %v1889 = vpop.f32.mrf.mxu0
    %v1890 = vadd.f32 %v1823, %v1889
    %1891 = vmatmul.bf16.gmra.mxu0 %v1800
    %v1892 = vpop.f32.mrf.mxu0
    %v1893 = vadd.f32 %v1823, %v1892
    %v1894 = vpop.f32.mrf.mxu0
    %v1895 = vadd.f32 %v1823, %v1894
    %1896 = vmatmul.bf16.gmra.mxu0 %v1803
    %v1897 = vpop.f32.mrf.mxu0
    %v1898 = vadd.f32 %v1823, %v1897
    %v1899 = vpop.f32.mrf.mxu0
    %v1900 = vadd.f32 %v1823, %v1899
    %1901 = vdwg.mxu0
    %v1902 = vadd.f32 %v138, %v1883
    %v1903 = vadd.f32 %v139, %v1885
    %v1904 = vadd.f32 %v140, %v1888
    %v1905 = vadd.f32 %v141, %v1890
    %v1906 = vadd.f32 %v142, %v1893
    %v1907 = vadd.f32 %v143, %v1895
    %v1908 = vadd.f32 %v144, %v1898
    %v1909 = vadd.f32 %v145, %v1900
    %1910 = vadd.xlane.f32.xlu0 %v1902
    %v1911 = vpop.xlane.xlu0 %1910
    %1912 = vadd.xlane.f32.xlu0 %v1903
    %v1913 = vpop.xlane.xlu0 %1912
    %1914 = vadd.xlane.f32.xlu0 %v1904
    %v1915 = vpop.xlane.xlu0 %1914
    %1916 = vadd.xlane.f32.xlu0 %v1905
    %v1917 = vpop.xlane.xlu0 %1916
    %1918 = vadd.xlane.f32.xlu0 %v1906
    %v1919 = vpop.xlane.xlu0 %1918
    %1920 = vadd.xlane.f32.xlu0 %v1907
    %v1921 = vpop.xlane.xlu0 %1920
    %1922 = vadd.xlane.f32.xlu0 %v1908
    %v1923 = vpop.xlane.xlu0 %1922
    %1924 = vadd.xlane.f32.xlu0 %v1909
    %v1925 = vpop.xlane.xlu0 %1924
    %v1926 = vrcp.pop 128.0
    %v1927 = vmul.f32 128.0, %v1926
    %v1928 = vsub.f32 1.0, %v1927
    %v1929 = vmul.f32 %v1926, %v1928
    %v1930 = vadd.f32 %v1926, %v1929
    %vm1931 = vweird.f32 %v1926
    %v1932 = vsel %vm1931, %v1926, %v1930
    %v1933 = vmul.f32 %v1911, %v1932
    %v1934 = vmul.f32 %v1913, %v1932
    %v1935 = vmul.f32 %v1915, %v1932
    %v1936 = vmul.f32 %v1917, %v1932
    %v1937 = vmul.f32 %v1919, %v1932
    %v1938 = vmul.f32 %v1921, %v1932
    %v1939 = vmul.f32 %v1923, %v1932
    %v1940 = vmul.f32 %v1925, %v1932
    %v1941 = vsub.f32 %v1902, %v1933
    %v1942 = vsub.f32 %v1903, %v1934
    %v1943 = vsub.f32 %v1904, %v1935
    %v1944 = vsub.f32 %v1905, %v1936
    %v1945 = vsub.f32 %v1906, %v1937
    %v1946 = vsub.f32 %v1907, %v1938
    %v1947 = vsub.f32 %v1908, %v1939
    %v1948 = vsub.f32 %v1909, %v1940
    %v1949 = vmul.f32 %v1941, %v1941
    %v1950 = vmul.f32 %v1942, %v1942
    %v1951 = vmul.f32 %v1943, %v1943
    %v1952 = vmul.f32 %v1944, %v1944
    %v1953 = vmul.f32 %v1945, %v1945
    %v1954 = vmul.f32 %v1946, %v1946
    %v1955 = vmul.f32 %v1947, %v1947
    %v1956 = vmul.f32 %v1948, %v1948
    %1957 = vadd.xlane.f32.xlu0 %v1949
    %v1958 = vpop.xlane.xlu0 %1957
    %1959 = vadd.xlane.f32.xlu0 %v1950
    %v1960 = vpop.xlane.xlu0 %1959
    %1961 = vadd.xlane.f32.xlu0 %v1951
    %v1962 = vpop.xlane.xlu0 %1961
    %1963 = vadd.xlane.f32.xlu0 %v1952
    %v1964 = vpop.xlane.xlu0 %1963
    %1965 = vadd.xlane.f32.xlu0 %v1953
    %v1966 = vpop.xlane.xlu0 %1965
    %1967 = vadd.xlane.f32.xlu0 %v1954
    %v1968 = vpop.xlane.xlu0 %1967
    %1969 = vadd.xlane.f32.xlu0 %v1955
    %v1970 = vpop.xlane.xlu0 %1969
    %1971 = vadd.xlane.f32.xlu0 %v1956
    %v1972 = vpop.xlane.xlu0 %1971
    %v1973 = vmul.f32 %v1958, %v1932
    %v1974 = vmul.f32 %v1960, %v1932
    %v1975 = vmul.f32 %v1962, %v1932
    %v1976 = vmul.f32 %v1964, %v1932
    %v1977 = vmul.f32 %v1966, %v1932
    %v1978 = vmul.f32 %v1968, %v1932
    %v1979 = vmul.f32 %v1970, %v1932
    %v1980 = vmul.f32 %v1972, %v1932
    %v1981 = vadd.f32 %v1973, 1e-05
    %v1982 = vadd.f32 %v1974, 1e-05
    %v1983 = vadd.f32 %v1975, 1e-05
    %v1984 = vadd.f32 %v1976, 1e-05
    %v1985 = vadd.f32 %v1977, 1e-05
    %v1986 = vadd.f32 %v1978, 1e-05
    %v1987 = vadd.f32 %v1979, 1e-05
    %v1988 = vadd.f32 %v1980, 1e-05
    %v1989 = vrsqrt.pop %v1981
    %v1990 = vmul.f32 %v1989, %v1981
    %v1991 = vmul.f32 %v1990, %v1989
    %v1992 = vmul.f32 0.5, %v1991
    %v1993 = vsub.f32 1.5, %v1992
    %v1994 = vmul.f32 %v1989, %v1993
    %vm1995 = vweird.f32 %v1981
    %vm1996 = vweird.f32 %v1989
    %vm1997 = vmor %vm1995, %vm1996
    %v1998 = vsel %vm1997, %v1989, %v1994
    %v1999 = vrsqrt.pop %v1982
    %v2000 = vmul.f32 %v1999, %v1982
    %v2001 = vmul.f32 %v2000, %v1999
    %v2002 = vmul.f32 0.5, %v2001
    %v2003 = vsub.f32 1.5, %v2002
    %v2004 = vmul.f32 %v1999, %v2003
    %vm2005 = vweird.f32 %v1982
    %vm2006 = vweird.f32 %v1999
    %vm2007 = vmor %vm2005, %vm2006
    %v2008 = vsel %vm2007, %v1999, %v2004
    %v2009 = vrsqrt.pop %v1983
    %v2010 = vmul.f32 %v2009, %v1983
    %v2011 = vmul.f32 %v2010, %v2009
    %v2012 = vmul.f32 0.5, %v2011
    %v2013 = vsub.f32 1.5, %v2012
    %v2014 = vmul.f32 %v2009, %v2013
    %vm2015 = vweird.f32 %v1983
    %vm2016 = vweird.f32 %v2009
    %vm2017 = vmor %vm2015, %vm2016
    %v2018 = vsel %vm2017, %v2009, %v2014
    %v2019 = vrsqrt.pop %v1984
    %v2020 = vmul.f32 %v2019, %v1984
    %v2021 = vmul.f32 %v2020, %v2019
    %v2022 = vmul.f32 0.5, %v2021
    %v2023 = vsub.f32 1.5, %v2022
    %v2024 = vmul.f32 %v2019, %v2023
    %vm2025 = vweird.f32 %v1984
    %vm2026 = vweird.f32 %v2019
    %vm2027 = vmor %vm2025, %vm2026
    %v2028 = vsel %vm2027, %v2019, %v2024
    %v2029 = vrsqrt.pop %v1985
    %v2030 = vmul.f32 %v2029, %v1985
    %v2031 = vmul.f32 %v2030, %v2029
    %v2032 = vmul.f32 0.5, %v2031
    %v2033 = vsub.f32 1.5, %v2032
    %v2034 = vmul.f32 %v2029, %v2033
    %vm2035 = vweird.f32 %v1985
    %vm2036 = vweird.f32 %v2029
    %vm2037 = vmor %vm2035, %vm2036
    %v2038 = vsel %vm2037, %v2029, %v2034
    %v2039 = vrsqrt.pop %v1986
    %v2040 = vmul.f32 %v2039, %v1986
    %v2041 = vmul.f32 %v2040, %v2039
    %v2042 = vmul.f32 0.5, %v2041
    %v2043 = vsub.f32 1.5, %v2042
    %v2044 = vmul.f32 %v2039, %v2043
    %vm2045 = vweird.f32 %v1986
    %vm2046 = vweird.f32 %v2039
    %vm2047 = vmor %vm2045, %vm2046
    %v2048 = vsel %vm2047, %v2039, %v2044
    %v2049 = vrsqrt.pop %v1987
    %v2050 = vmul.f32 %v2049, %v1987
    %v2051 = vmul.f32 %v2050, %v2049
    %v2052 = vmul.f32 0.5, %v2051
    %v2053 = vsub.f32 1.5, %v2052
    %v2054 = vmul.f32 %v2049, %v2053
    %vm2055 = vweird.f32 %v1987
    %vm2056 = vweird.f32 %v2049
    %vm2057 = vmor %vm2055, %vm2056
    %v2058 = vsel %vm2057, %v2049, %v2054
    %v2059 = vrsqrt.pop %v1988
    %v2060 = vmul.f32 %v2059, %v1988
    %v2061 = vmul.f32 %v2060, %v2059
    %v2062 = vmul.f32 0.5, %v2061
    %v2063 = vsub.f32 1.5, %v2062
    %v2064 = vmul.f32 %v2059, %v2063
    %vm2065 = vweird.f32 %v1988
    %vm2066 = vweird.f32 %v2059
    %vm2067 = vmor %vm2065, %vm2066
    %v2068 = vsel %vm2067, %v2059, %v2064
    %v2069 = vmul.f32 %v1941, %v1998
    %v2070 = vmul.f32 %v1942, %v2008
    %v2071 = vmul.f32 %v1943, %v2018
    %v2072 = vmul.f32 %v1944, %v2028
    %v2073 = vmul.f32 %v1945, %v2038
    %v2074 = vmul.f32 %v1946, %v2048
    %v2075 = vmul.f32 %v1947, %v2058
    %v2076 = vmul.f32 %v1948, %v2068
    %v2077 = vld [vmem:[%s5] sm:$0x1]
    %v2079 = vperm.slane %v2077, 0
    %v2081 = vmul.f32 %v2069, %v2079
    %v2082 = vmul.f32 %v2070, %v2079
    %v2083 = vmul.f32 %v2071, %v2079
    %v2084 = vmul.f32 %v2072, %v2079
    %v2085 = vmul.f32 %v2073, %v2079
    %v2086 = vmul.f32 %v2074, %v2079
    %v2087 = vmul.f32 %v2075, %v2079
    %v2088 = vmul.f32 %v2076, %v2079
    %v2089 = vld [vmem:[%s6] sm:$0x1]
    %v2091 = vperm.slane %v2089, 0
    %v2093 = vadd.f32 %v2081, %v2091
    %v2094 = vadd.f32 %v2082, %v2091
    %v2095 = vadd.f32 %v2083, %v2091
    %v2096 = vadd.f32 %v2084, %v2091
    %v2097 = vadd.f32 %v2085, %v2091
    %v2098 = vadd.f32 %v2086, %v2091
    %v2099 = vadd.f32 %v2087, %v2091
    %v2100 = vadd.f32 %v2088, %v2091
    %v2101 = vpack.c.bf16 %v2094, %v2093
    %v2102 = vpack.c.bf16 %v2096, %v2095
    %v2103 = vpack.c.bf16 %v2098, %v2097
    %v2104 = vpack.c.bf16 %v2100, %v2099
    %v2105 = vld [vmem:[#allocation10] sm:$0xff]
    %v2106 = vld [vmem:[#allocation10 + $0x8] sm:$0xff]
    %v2107 = vld [vmem:[#allocation10 + $0x10] sm:$0xff]
    %v2108 = vld [vmem:[#allocation10 + $0x18] sm:$0xff]
    %v2109 = vld [vmem:[#allocation10 + $0x20] sm:$0xff]
    %v2110 = vld [vmem:[#allocation10 + $0x28] sm:$0xff]
    %v2111 = vld [vmem:[#allocation10 + $0x30] sm:$0xff]
    %v2112 = vld [vmem:[#allocation10 + $0x38] sm:$0xff]
    %v2113 = vld [vmem:[#allocation10 + $0x40] sm:$0xff]
    %v2114 = vld [vmem:[#allocation10 + $0x48] sm:$0xff]
    %v2115 = vld [vmem:[#allocation10 + $0x50] sm:$0xff]
    %v2116 = vld [vmem:[#allocation10 + $0x58] sm:$0xff]
    %v2117 = vld [vmem:[#allocation10 + $0x60] sm:$0xff]
    %v2118 = vld [vmem:[#allocation10 + $0x68] sm:$0xff]
    %v2119 = vld [vmem:[#allocation10 + $0x70] sm:$0xff]
    %v2120 = vld [vmem:[#allocation10 + $0x78] sm:$0xff]
    %v2121 = vld [vmem:[%s8] sm:$0x3]
    %v2123 = vperm.slane %v2121, 0
    %v2124 = vperm.slane %v2121, 1
    %v2143 = vunpack.c.l.b16 %v2105
    %v2144 = vunpack.c.h.b16 %v2105
    %v2145 = vunpack.c.l.b16 %v2106
    %v2146 = vunpack.c.h.b16 %v2106
    %v2147 = vunpack.c.l.b16 %v2107
    %v2148 = vunpack.c.h.b16 %v2107
    %v2149 = vunpack.c.l.b16 %v2108
    %v2150 = vunpack.c.h.b16 %v2108
    %v2151 = vunpack.c.l.b16 %v2109
    %v2152 = vunpack.c.h.b16 %v2109
    %v2153 = vunpack.c.l.b16 %v2110
    %v2154 = vunpack.c.h.b16 %v2110
    %v2155 = vunpack.c.l.b16 %v2111
    %v2156 = vunpack.c.h.b16 %v2111
    %v2157 = vunpack.c.l.b16 %v2112
    %v2158 = vunpack.c.h.b16 %v2112
    %v2159 = vunpack.c.l.b16 %v2113
    %v2160 = vunpack.c.h.b16 %v2113
    %v2161 = vunpack.c.l.b16 %v2114
    %v2162 = vunpack.c.h.b16 %v2114
    %v2163 = vunpack.c.l.b16 %v2115
    %v2164 = vunpack.c.h.b16 %v2115
    %v2165 = vunpack.c.l.b16 %v2116
    %v2166 = vunpack.c.h.b16 %v2116
    %v2167 = vunpack.c.l.b16 %v2117
    %v2168 = vunpack.c.h.b16 %v2117
    %v2169 = vunpack.c.l.b16 %v2118
    %v2170 = vunpack.c.h.b16 %v2118
    %v2171 = vunpack.c.l.b16 %v2119
    %v2172 = vunpack.c.h.b16 %v2119
    %v2173 = vunpack.c.l.b16 %v2120
    %v2174 = vunpack.c.h.b16 %v2120
    %v2175 = vpack.c.b16 %v2145, %v2143
    %v2176 = vpack.c.b16 %v2146, %v2144
    %v2177 = vpack.c.b16 %v2149, %v2147
    %v2178 = vpack.c.b16 %v2150, %v2148
    %v2179 = vpack.c.b16 %v2153, %v2151
    %v2180 = vpack.c.b16 %v2154, %v2152
    %v2181 = vpack.c.b16 %v2157, %v2155
    %v2182 = vpack.c.b16 %v2158, %v2156
    %v2183 = vpack.c.b16 %v2161, %v2159
    %v2184 = vpack.c.b16 %v2162, %v2160
    %v2185 = vpack.c.b16 %v2165, %v2163
    %v2186 = vpack.c.b16 %v2166, %v2164
    %v2187 = vpack.c.b16 %v2169, %v2167
    %v2188 = vpack.c.b16 %v2170, %v2168
    %v2189 = vpack.c.b16 %v2173, %v2171
    %v2190 = vpack.c.b16 %v2174, %v2172
    %2207 = vmatpush.bf16.msra.mxu0 %v2189
    %2208 = vmatpush.bf16.msra.mxu0 %v2187
    %2209 = vmatpush.bf16.msra.mxu0 %v2185
    %2210 = vmatpush.bf16.msra.mxu0 %v2183
    %2211 = vmatpush.bf16.msra.mxu0 %v2181
    %2212 = vmatpush.bf16.msra.mxu0 %v2179
    %2213 = vmatpush.bf16.msra.mxu0 %v2177
    %2214 = vmatpush.bf16.msra.mxu0 %v2175
    %2215 = vmatmul.bf16.gmra.mxu0 %v2101
    %v2216 = vpop.f32.mrf.mxu0
    %v2217 = vadd.f32 %v2123, %v2216
    %v2218 = vpop.f32.mrf.mxu0
    %v2219 = vadd.f32 %v2123, %v2218
    %2220 = vmatmul.bf16.gmra.mxu0 %v2102
    %v2221 = vpop.f32.mrf.mxu0
    %v2222 = vadd.f32 %v2123, %v2221
    %v2223 = vpop.f32.mrf.mxu0
    %v2224 = vadd.f32 %v2123, %v2223
    %2225 = vmatmul.bf16.gmra.mxu0 %v2103
    %v2226 = vpop.f32.mrf.mxu0
    %v2227 = vadd.f32 %v2123, %v2226
    %v2228 = vpop.f32.mrf.mxu0
    %v2229 = vadd.f32 %v2123, %v2228
    %2230 = vmatmul.bf16.gmra.mxu0 %v2104
    %v2231 = vpop.f32.mrf.mxu0
    %v2232 = vadd.f32 %v2123, %v2231
    %v2233 = vpop.f32.mrf.mxu0
    %v2234 = vadd.f32 %v2123, %v2233
    %2235 = vdwg.mxu0
    %2236 = vmatpush.bf16.msra.mxu0 %v2190
    %2237 = vmatpush.bf16.msra.mxu0 %v2188
    %2238 = vmatpush.bf16.msra.mxu0 %v2186
    %2239 = vmatpush.bf16.msra.mxu0 %v2184
    %2240 = vmatpush.bf16.msra.mxu0 %v2182
    %2241 = vmatpush.bf16.msra.mxu0 %v2180
    %2242 = vmatpush.bf16.msra.mxu0 %v2178
    %2243 = vmatpush.bf16.msra.mxu0 %v2176
    %2244 = vmatmul.bf16.gmra.mxu0 %v2101
    %v2245 = vpop.f32.mrf.mxu0
    %v2246 = vadd.f32 %v2124, %v2245
    %v2247 = vpop.f32.mrf.mxu0
    %v2248 = vadd.f32 %v2124, %v2247
    %2249 = vmatmul.bf16.gmra.mxu0 %v2102
    %v2250 = vpop.f32.mrf.mxu0
    %v2251 = vadd.f32 %v2124, %v2250
    %v2252 = vpop.f32.mrf.mxu0
    %v2253 = vadd.f32 %v2124, %v2252
    %2254 = vmatmul.bf16.gmra.mxu0 %v2103
    %v2255 = vpop.f32.mrf.mxu0
    %v2256 = vadd.f32 %v2124, %v2255
    %v2257 = vpop.f32.mrf.mxu0
    %v2258 = vadd.f32 %v2124, %v2257
    %2259 = vmatmul.bf16.gmra.mxu0 %v2104
    %v2260 = vpop.f32.mrf.mxu0
    %v2261 = vadd.f32 %v2124, %v2260
    %v2262 = vpop.f32.mrf.mxu0
    %v2263 = vadd.f32 %v2124, %v2262
    %2264 = vdwg.mxu0
    %v2265 = vmax.f32 %v2217, 0.0
    %v2266 = vmax.f32 %v2246, 0.0
    %v2267 = vmax.f32 %v2219, 0.0
    %v2268 = vmax.f32 %v2248, 0.0
    %v2269 = vmax.f32 %v2222, 0.0
    %v2270 = vmax.f32 %v2251, 0.0
    %v2271 = vmax.f32 %v2224, 0.0
    %v2272 = vmax.f32 %v2253, 0.0
    %v2273 = vmax.f32 %v2227, 0.0
    %v2274 = vmax.f32 %v2256, 0.0
    %v2275 = vmax.f32 %v2229, 0.0
    %v2276 = vmax.f32 %v2258, 0.0
    %v2277 = vmax.f32 %v2232, 0.0
    %v2278 = vmax.f32 %v2261, 0.0
    %v2279 = vmax.f32 %v2234, 0.0
    %v2280 = vmax.f32 %v2263, 0.0
    %v2281 = vpack.c.bf16 %v2267, %v2265
    %v2282 = vpack.c.bf16 %v2268, %v2266
    %v2283 = vpack.c.bf16 %v2271, %v2269
    %v2284 = vpack.c.bf16 %v2272, %v2270
    %v2285 = vpack.c.bf16 %v2275, %v2273
    %v2286 = vpack.c.bf16 %v2276, %v2274
    %v2287 = vpack.c.bf16 %v2279, %v2277
    %v2288 = vpack.c.bf16 %v2280, %v2278
    %v2289 = vld [vmem:[#allocation11] sm:$0xf]
    %v2290 = vld [vmem:[#allocation11 + $0x4] sm:$0xf]
    %v2291 = vld [vmem:[#allocation11 + $0x8] sm:$0xf]
    %v2292 = vld [vmem:[#allocation11 + $0xc] sm:$0xf]
    %v2293 = vld [vmem:[#allocation11 + $0x10] sm:$0xf]
    %v2294 = vld [vmem:[#allocation11 + $0x14] sm:$0xf]
    %v2295 = vld [vmem:[#allocation11 + $0x18] sm:$0xf]
    %v2296 = vld [vmem:[#allocation11 + $0x1c] sm:$0xf]
    %v2297 = vld [vmem:[#allocation11 + $0x20] sm:$0xf]
    %v2298 = vld [vmem:[#allocation11 + $0x24] sm:$0xf]
    %v2299 = vld [vmem:[#allocation11 + $0x28] sm:$0xf]
    %v2300 = vld [vmem:[#allocation11 + $0x2c] sm:$0xf]
    %v2301 = vld [vmem:[#allocation11 + $0x30] sm:$0xf]
    %v2302 = vld [vmem:[#allocation11 + $0x34] sm:$0xf]
    %v2303 = vld [vmem:[#allocation11 + $0x38] sm:$0xf]
    %v2304 = vld [vmem:[#allocation11 + $0x3c] sm:$0xf]
    %v2305 = vld [vmem:[#allocation11 + $0x40] sm:$0xf]
    %v2306 = vld [vmem:[#allocation11 + $0x44] sm:$0xf]
    %v2307 = vld [vmem:[#allocation11 + $0x48] sm:$0xf]
    %v2308 = vld [vmem:[#allocation11 + $0x4c] sm:$0xf]
    %v2309 = vld [vmem:[#allocation11 + $0x50] sm:$0xf]
    %v2310 = vld [vmem:[#allocation11 + $0x54] sm:$0xf]
    %v2311 = vld [vmem:[#allocation11 + $0x58] sm:$0xf]
    %v2312 = vld [vmem:[#allocation11 + $0x5c] sm:$0xf]
    %v2313 = vld [vmem:[#allocation11 + $0x60] sm:$0xf]
    %v2314 = vld [vmem:[#allocation11 + $0x64] sm:$0xf]
    %v2315 = vld [vmem:[#allocation11 + $0x68] sm:$0xf]
    %v2316 = vld [vmem:[#allocation11 + $0x6c] sm:$0xf]
    %v2317 = vld [vmem:[#allocation11 + $0x70] sm:$0xf]
    %v2318 = vld [vmem:[#allocation11 + $0x74] sm:$0xf]
    %v2319 = vld [vmem:[#allocation11 + $0x78] sm:$0xf]
    %v2320 = vld [vmem:[#allocation11 + $0x7c] sm:$0xf]
    %v2321 = vld [vmem:[%s10] sm:$0x1]
    %v2323 = vperm.slane %v2321, 0
    %v2357 = vunpack.c.l.b16 %v2289
    %v2358 = vunpack.c.l.b16 %v2290
    %v2359 = vunpack.c.l.b16 %v2291
    %v2360 = vunpack.c.l.b16 %v2292
    %v2361 = vunpack.c.l.b16 %v2293
    %v2362 = vunpack.c.l.b16 %v2294
    %v2363 = vunpack.c.l.b16 %v2295
    %v2364 = vunpack.c.l.b16 %v2296
    %v2365 = vunpack.c.l.b16 %v2297
    %v2366 = vunpack.c.l.b16 %v2298
    %v2367 = vunpack.c.l.b16 %v2299
    %v2368 = vunpack.c.l.b16 %v2300
    %v2369 = vunpack.c.l.b16 %v2301
    %v2370 = vunpack.c.l.b16 %v2302
    %v2371 = vunpack.c.l.b16 %v2303
    %v2372 = vunpack.c.l.b16 %v2304
    %v2373 = vunpack.c.l.b16 %v2305
    %v2374 = vunpack.c.l.b16 %v2306
    %v2375 = vunpack.c.l.b16 %v2307
    %v2376 = vunpack.c.l.b16 %v2308
    %v2377 = vunpack.c.l.b16 %v2309
    %v2378 = vunpack.c.l.b16 %v2310
    %v2379 = vunpack.c.l.b16 %v2311
    %v2380 = vunpack.c.l.b16 %v2312
    %v2381 = vunpack.c.l.b16 %v2313
    %v2382 = vunpack.c.l.b16 %v2314
    %v2383 = vunpack.c.l.b16 %v2315
    %v2384 = vunpack.c.l.b16 %v2316
    %v2385 = vunpack.c.l.b16 %v2317
    %v2386 = vunpack.c.l.b16 %v2318
    %v2387 = vunpack.c.l.b16 %v2319
    %v2388 = vunpack.c.l.b16 %v2320
    %v2389 = vpack.c.b16 %v2358, %v2357
    %v2390 = vpack.c.b16 %v2360, %v2359
    %v2391 = vpack.c.b16 %v2362, %v2361
    %v2392 = vpack.c.b16 %v2364, %v2363
    %v2393 = vpack.c.b16 %v2366, %v2365
    %v2394 = vpack.c.b16 %v2368, %v2367
    %v2395 = vpack.c.b16 %v2370, %v2369
    %v2396 = vpack.c.b16 %v2372, %v2371
    %v2397 = vpack.c.b16 %v2374, %v2373
    %v2398 = vpack.c.b16 %v2376, %v2375
    %v2399 = vpack.c.b16 %v2378, %v2377
    %v2400 = vpack.c.b16 %v2380, %v2379
    %v2401 = vpack.c.b16 %v2382, %v2381
    %v2402 = vpack.c.b16 %v2384, %v2383
    %v2403 = vpack.c.b16 %v2386, %v2385
    %v2404 = vpack.c.b16 %v2388, %v2387
    %2421 = vmatpush.bf16.msra.mxu0 %v2396
    %2422 = vmatpush.bf16.msra.mxu0 %v2395
    %2423 = vmatpush.bf16.msra.mxu0 %v2394
    %2424 = vmatpush.bf16.msra.mxu0 %v2393
    %2425 = vmatpush.bf16.msra.mxu0 %v2392
    %2426 = vmatpush.bf16.msra.mxu0 %v2391
    %2427 = vmatpush.bf16.msra.mxu0 %v2390
    %2428 = vmatpush.bf16.msra.mxu0 %v2389
    %2429 = vmatmul.bf16.gmra.mxu0 %v2281
    %v2430 = vpop.f32.mrf.mxu0
    %v2431 = vadd.f32 %v2323, %v2430
    %v2432 = vpop.f32.mrf.mxu0
    %v2433 = vadd.f32 %v2323, %v2432
    %2434 = vmatmul.bf16.gmra.mxu0 %v2283
    %v2435 = vpop.f32.mrf.mxu0
    %v2436 = vadd.f32 %v2323, %v2435
    %v2437 = vpop.f32.mrf.mxu0
    %v2438 = vadd.f32 %v2323, %v2437
    %2439 = vmatmul.bf16.gmra.mxu0 %v2285
    %v2440 = vpop.f32.mrf.mxu0
    %v2441 = vadd.f32 %v2323, %v2440
    %v2442 = vpop.f32.mrf.mxu0
    %v2443 = vadd.f32 %v2323, %v2442
    %2444 = vmatmul.bf16.gmra.mxu0 %v2287
    %v2445 = vpop.f32.mrf.mxu0
    %v2446 = vadd.f32 %v2323, %v2445
    %v2447 = vpop.f32.mrf.mxu0
    %v2448 = vadd.f32 %v2323, %v2447
    %2449 = vdwg.mxu0
    %2450 = vmatpush.bf16.msra.mxu0 %v2404
    %2451 = vmatpush.bf16.msra.mxu0 %v2403
    %2452 = vmatpush.bf16.msra.mxu0 %v2402
    %2453 = vmatpush.bf16.msra.mxu0 %v2401
    %2454 = vmatpush.bf16.msra.mxu0 %v2400
    %2455 = vmatpush.bf16.msra.mxu0 %v2399
    %2456 = vmatpush.bf16.msra.mxu0 %v2398
    %2457 = vmatpush.bf16.msra.mxu0 %v2397
    %2458 = vmatmul.bf16.gmra.mxu0 %v2282
    %v2459 = vpop.f32.mrf.mxu0
    %v2460 = vadd.f32 %v2431, %v2459
    %v2461 = vpop.f32.mrf.mxu0
    %v2462 = vadd.f32 %v2433, %v2461
    %2463 = vmatmul.bf16.gmra.mxu0 %v2284
    %v2464 = vpop.f32.mrf.mxu0
    %v2465 = vadd.f32 %v2436, %v2464
    %v2466 = vpop.f32.mrf.mxu0
    %v2467 = vadd.f32 %v2438, %v2466
    %2468 = vmatmul.bf16.gmra.mxu0 %v2286
    %v2469 = vpop.f32.mrf.mxu0
    %v2470 = vadd.f32 %v2441, %v2469
    %v2471 = vpop.f32.mrf.mxu0
    %v2472 = vadd.f32 %v2443, %v2471
    %2473 = vmatmul.bf16.gmra.mxu0 %v2288
    %v2474 = vpop.f32.mrf.mxu0
    %v2475 = vadd.f32 %v2446, %v2474
    %v2476 = vpop.f32.mrf.mxu0
    %v2477 = vadd.f32 %v2448, %v2476
    %2478 = vdwg.mxu0
    %v2479 = vadd.f32 %v2093, %v2460
    %v2480 = vadd.f32 %v2094, %v2462
    %v2481 = vadd.f32 %v2095, %v2465
    %v2482 = vadd.f32 %v2096, %v2467
    %v2483 = vadd.f32 %v2097, %v2470
    %v2484 = vadd.f32 %v2098, %v2472
    %v2485 = vadd.f32 %v2099, %v2475
    %v2486 = vadd.f32 %v2100, %v2477
    %2487 = vadd.xlane.f32.xlu0 %v2479
    %v2488 = vpop.xlane.xlu0 %2487
    %2489 = vadd.xlane.f32.xlu0 %v2480
    %v2490 = vpop.xlane.xlu0 %2489
    %2491 = vadd.xlane.f32.xlu0 %v2481
    %v2492 = vpop.xlane.xlu0 %2491
    %2493 = vadd.xlane.f32.xlu0 %v2482
    %v2494 = vpop.xlane.xlu0 %2493
    %2495 = vadd.xlane.f32.xlu0 %v2483
    %v2496 = vpop.xlane.xlu0 %2495
    %2497 = vadd.xlane.f32.xlu0 %v2484
    %v2498 = vpop.xlane.xlu0 %2497
    %2499 = vadd.xlane.f32.xlu0 %v2485
    %v2500 = vpop.xlane.xlu0 %2499
    %2501 = vadd.xlane.f32.xlu0 %v2486
    %v2502 = vpop.xlane.xlu0 %2501
    %v2503 = vmul.f32 %v2488, %v1932
    %v2504 = vmul.f32 %v2490, %v1932
    %v2505 = vmul.f32 %v2492, %v1932
    %v2506 = vmul.f32 %v2494, %v1932
    %v2507 = vmul.f32 %v2496, %v1932
    %v2508 = vmul.f32 %v2498, %v1932
    %v2509 = vmul.f32 %v2500, %v1932
    %v2510 = vmul.f32 %v2502, %v1932
    %v2511 = vsub.f32 %v2479, %v2503
    %v2512 = vsub.f32 %v2480, %v2504
    %v2513 = vsub.f32 %v2481, %v2505
    %v2514 = vsub.f32 %v2482, %v2506
    %v2515 = vsub.f32 %v2483, %v2507
    %v2516 = vsub.f32 %v2484, %v2508
    %v2517 = vsub.f32 %v2485, %v2509
    %v2518 = vsub.f32 %v2486, %v2510
    %v2519 = vmul.f32 %v2511, %v2511
    %v2520 = vmul.f32 %v2512, %v2512
    %v2521 = vmul.f32 %v2513, %v2513
    %v2522 = vmul.f32 %v2514, %v2514
    %v2523 = vmul.f32 %v2515, %v2515
    %v2524 = vmul.f32 %v2516, %v2516
    %v2525 = vmul.f32 %v2517, %v2517
    %v2526 = vmul.f32 %v2518, %v2518
    %2527 = vadd.xlane.f32.xlu0 %v2519
    %v2528 = vpop.xlane.xlu0 %2527
    %2529 = vadd.xlane.f32.xlu0 %v2520
    %v2530 = vpop.xlane.xlu0 %2529
    %2531 = vadd.xlane.f32.xlu0 %v2521
    %v2532 = vpop.xlane.xlu0 %2531
    %2533 = vadd.xlane.f32.xlu0 %v2522
    %v2534 = vpop.xlane.xlu0 %2533
    %2535 = vadd.xlane.f32.xlu0 %v2523
    %v2536 = vpop.xlane.xlu0 %2535
    %2537 = vadd.xlane.f32.xlu0 %v2524
    %v2538 = vpop.xlane.xlu0 %2537
    %2539 = vadd.xlane.f32.xlu0 %v2525
    %v2540 = vpop.xlane.xlu0 %2539
    %2541 = vadd.xlane.f32.xlu0 %v2526
    %v2542 = vpop.xlane.xlu0 %2541
    %v2543 = vmul.f32 %v2528, %v1932
    %v2544 = vmul.f32 %v2530, %v1932
    %v2545 = vmul.f32 %v2532, %v1932
    %v2546 = vmul.f32 %v2534, %v1932
    %v2547 = vmul.f32 %v2536, %v1932
    %v2548 = vmul.f32 %v2538, %v1932
    %v2549 = vmul.f32 %v2540, %v1932
    %v2550 = vmul.f32 %v2542, %v1932
    %v2551 = vadd.f32 %v2543, 1e-05
    %v2552 = vadd.f32 %v2544, 1e-05
    %v2553 = vadd.f32 %v2545, 1e-05
    %v2554 = vadd.f32 %v2546, 1e-05
    %v2555 = vadd.f32 %v2547, 1e-05
    %v2556 = vadd.f32 %v2548, 1e-05
    %v2557 = vadd.f32 %v2549, 1e-05
    %v2558 = vadd.f32 %v2550, 1e-05
    %v2559 = vrsqrt.pop %v2551
    %v2560 = vmul.f32 %v2559, %v2551
    %v2561 = vmul.f32 %v2560, %v2559
    %v2562 = vmul.f32 0.5, %v2561
    %v2563 = vsub.f32 1.5, %v2562
    %v2564 = vmul.f32 %v2559, %v2563
    %vm2565 = vweird.f32 %v2551
    %vm2566 = vweird.f32 %v2559
    %vm2567 = vmor %vm2565, %vm2566
    %v2568 = vsel %vm2567, %v2559, %v2564
    %v2569 = vrsqrt.pop %v2552
    %v2570 = vmul.f32 %v2569, %v2552
    %v2571 = vmul.f32 %v2570, %v2569
    %v2572 = vmul.f32 0.5, %v2571
    %v2573 = vsub.f32 1.5, %v2572
    %v2574 = vmul.f32 %v2569, %v2573
    %vm2575 = vweird.f32 %v2552
    %vm2576 = vweird.f32 %v2569
    %vm2577 = vmor %vm2575, %vm2576
    %v2578 = vsel %vm2577, %v2569, %v2574
    %v2579 = vrsqrt.pop %v2553
    %v2580 = vmul.f32 %v2579, %v2553
    %v2581 = vmul.f32 %v2580, %v2579
    %v2582 = vmul.f32 0.5, %v2581
    %v2583 = vsub.f32 1.5, %v2582
    %v2584 = vmul.f32 %v2579, %v2583
    %vm2585 = vweird.f32 %v2553
    %vm2586 = vweird.f32 %v2579
    %vm2587 = vmor %vm2585, %vm2586
    %v2588 = vsel %vm2587, %v2579, %v2584
    %v2589 = vrsqrt.pop %v2554
    %v2590 = vmul.f32 %v2589, %v2554
    %v2591 = vmul.f32 %v2590, %v2589
    %v2592 = vmul.f32 0.5, %v2591
    %v2593 = vsub.f32 1.5, %v2592
    %v2594 = vmul.f32 %v2589, %v2593
    %vm2595 = vweird.f32 %v2554
    %vm2596 = vweird.f32 %v2589
    %vm2597 = vmor %vm2595, %vm2596
    %v2598 = vsel %vm2597, %v2589, %v2594
    %v2599 = vrsqrt.pop %v2555
    %v2600 = vmul.f32 %v2599, %v2555
    %v2601 = vmul.f32 %v2600, %v2599
    %v2602 = vmul.f32 0.5, %v2601
    %v2603 = vsub.f32 1.5, %v2602
    %v2604 = vmul.f32 %v2599, %v2603
    %vm2605 = vweird.f32 %v2555
    %vm2606 = vweird.f32 %v2599
    %vm2607 = vmor %vm2605, %vm2606
    %v2608 = vsel %vm2607, %v2599, %v2604
    %v2609 = vrsqrt.pop %v2556
    %v2610 = vmul.f32 %v2609, %v2556
    %v2611 = vmul.f32 %v2610, %v2609
    %v2612 = vmul.f32 0.5, %v2611
    %v2613 = vsub.f32 1.5, %v2612
    %v2614 = vmul.f32 %v2609, %v2613
    %vm2615 = vweird.f32 %v2556
    %vm2616 = vweird.f32 %v2609
    %vm2617 = vmor %vm2615, %vm2616
    %v2618 = vsel %vm2617, %v2609, %v2614
    %v2619 = vrsqrt.pop %v2557
    %v2620 = vmul.f32 %v2619, %v2557
    %v2621 = vmul.f32 %v2620, %v2619
    %v2622 = vmul.f32 0.5, %v2621
    %v2623 = vsub.f32 1.5, %v2622
    %v2624 = vmul.f32 %v2619, %v2623
    %vm2625 = vweird.f32 %v2557
    %vm2626 = vweird.f32 %v2619
    %vm2627 = vmor %vm2625, %vm2626
    %v2628 = vsel %vm2627, %v2619, %v2624
    %v2629 = vrsqrt.pop %v2558
    %v2630 = vmul.f32 %v2629, %v2558
    %v2631 = vmul.f32 %v2630, %v2629
    %v2632 = vmul.f32 0.5, %v2631
    %v2633 = vsub.f32 1.5, %v2632
    %v2634 = vmul.f32 %v2629, %v2633
    %vm2635 = vweird.f32 %v2558
    %vm2636 = vweird.f32 %v2629
    %vm2637 = vmor %vm2635, %vm2636
    %v2638 = vsel %vm2637, %v2629, %v2634
    %v2639 = vmul.f32 %v2511, %v2568
    %v2640 = vmul.f32 %v2512, %v2578
    %v2641 = vmul.f32 %v2513, %v2588
    %v2642 = vmul.f32 %v2514, %v2598
    %v2643 = vmul.f32 %v2515, %v2608
    %v2644 = vmul.f32 %v2516, %v2618
    %v2645 = vmul.f32 %v2517, %v2628
    %v2646 = vmul.f32 %v2518, %v2638
    %v2647 = vld [vmem:[%s11] sm:$0x1]
    %v2649 = vperm.slane %v2647, 0
    %v2651 = vmul.f32 %v2639, %v2649
    %v2652 = vmul.f32 %v2640, %v2649
    %v2653 = vmul.f32 %v2641, %v2649
    %v2654 = vmul.f32 %v2642, %v2649
    %v2655 = vmul.f32 %v2643, %v2649
    %v2656 = vmul.f32 %v2644, %v2649
    %v2657 = vmul.f32 %v2645, %v2649
    %v2658 = vmul.f32 %v2646, %v2649
    %v2659 = vld [vmem:[%s12] sm:$0x1]
    %v2661 = vperm.slane %v2659, 0
    %v2663 = vadd.f32 %v2651, %v2661
    %v2664 = vadd.f32 %v2652, %v2661
    %v2665 = vadd.f32 %v2653, %v2661
    %v2666 = vadd.f32 %v2654, %v2661
    %v2667 = vadd.f32 %v2655, %v2661
    %v2668 = vadd.f32 %v2656, %v2661
    %v2669 = vadd.f32 %v2657, %v2661
    %v2670 = vadd.f32 %v2658, %v2661
    %2671 = vst [vmem:[#allocation13] sm:$0xff] %v2663
    %2672 = vst [vmem:[#allocation13 + $0x8] sm:$0xff] %v2664
    %2673 = vst [vmem:[#allocation13 + $0x10] sm:$0xff] %v2665
    %2674 = vst [vmem:[#allocation13 + $0x18] sm:$0xff] %v2666
    %2675 = vst [vmem:[#allocation13 + $0x20] sm:$0xff] %v2667
    %2676 = vst [vmem:[#allocation13 + $0x28] sm:$0xff] %v2668
    %2677 = vst [vmem:[#allocation13 + $0x30] sm:$0xff] %v2669
    %2678 = vst [vmem:[#allocation13 + $0x38] sm:$0xff] %v2670
    // Predicated region
    $region78: #{tpu_custom_call.1} parent=1 // pred_check
      _
    $region79: #{tpu_custom_call.1} parent=1 // pred_check_branch
      %2680 = sbr.rel (0) target = $region81
    $region80: #{tpu_custom_call.1} parent=1 // pred_region
      %2682 = vsyncadd [#allocation4], 0
      %s2683 = sshll.u32 [#allocation13], 4
      %s2684 = int_to_ptr.vmem [resolvable:$true] %s2683
      %s2685 = sshll.u32 %s13, 4
      %s2686 = int_to_ptr.hbm [resolvable:$true] %s2685
      %2691 = dma.vmem_to_hbm [thread:$0]  %s2684, 1024, %s2686, [#allocation4], 128, 128, 8
    $region81: #{tpu_custom_call.1} parent=1 // pred_fallthru
      _
    // Predicated region
    $region82: #{tpu_custom_call.1} parent=1 // pred_check
      _
    $region83: #{tpu_custom_call.1} parent=1 // pred_check_branch
      %2693 = sbr.rel (0) target = $region85
    $region84: #{tpu_custom_call.1} parent=1 // pred_region
      %2695 = dma.done [#allocation4], 1024
    $region85: #{tpu_custom_call.1} parent=1 // pred_fallthru
      _
    %2696 = vsyncpa [#allocation3], 1
    %2697 = vsyncpa [#allocation6], 1
    %2698 = vsyncpa [#allocation9], 1
    %2699 = vsyncpa [#allocation12], 1
    %2700 = vsyncpa [#allocation4], 1

</llo_original>
